<compile_context>
chip_gen: v7x
topology: tpu7x:2x2x1
jax: 0.10.0
libtpu: 0.0.40
codegen_flags: <defaults>
</compile_context>

<pallas_src>
import jax
import jax.numpy as jnp
from jax import lax
from jax.experimental import pallas as pl
from jax.experimental.pallas import tpu as pltpu


def gat_kernel(x_ref, gblk_ref, xbias_ref, w_ref, b_ref, o_ref):
    # x_ref:     (R, C)   rows of G batches stacked (R = G * N)
    # gblk_ref:  (R, R)   block-diagonal adjacency  kron(eye(G), graph)
    # xbias_ref: (R, R)   additive mask: 0 within-batch, -1e30 cross-batch
    # w_ref:     (C, Dp)  pre-transposed linear weight, zero-padded to Dp lanes
    # b_ref:     (1, Dp)  bias, zero-padded to Dp lanes
    # o_ref:     (R, Dp)
    hp = lax.Precision.HIGHEST  # full-f32 MXU passes -> matches the f32 reference

    # h = W(inputs) for the whole group in one MXU pass: [R, C] @ [C, Dp]
    h = jnp.dot(x_ref[...], w_ref[...],
                preferred_element_type=jnp.float32, precision=hp)        # [R, Dp]

    # scores = (h @ h^T) * block_diag(graph) for the whole group in one
    # dot_general (contract last axes of both operands -> no explicit .T).
    s = lax.dot_general(h, h, (((1,), (1,)), ((), ())),
                        preferred_element_type=jnp.float32, precision=hp)  # [R, R]
    s = s * gblk_ref[...]

    # masked_fill_(scores == 0, -1e16)  — exact module semantics (within batch).
    s = jnp.where(s == 0.0, jnp.float32(-1e16), s)

    # Push cross-batch entries to ~-1e30: exp underflows to exactly 0, so the
    # grouped softmax equals the per-batch softmax bit-for-bit.
    s = s + xbias_ref[...]

    # softmax over the last axis (exact divide; approx reciprocal removed).
    m = jnp.max(s, axis=-1, keepdims=True)
    e = jnp.exp(s - m)
    attn = e / jnp.sum(e, axis=-1, keepdims=True)                        # [R, R]

    # bmm(attention, h) + b — one MXU pass, bias broadcast once per group.
    out = jnp.dot(attn, h, preferred_element_type=jnp.float32, precision=hp)
    o_ref[...] = (out + b_ref[...]).astype(o_ref.dtype)


def prepare_params(w_t, b):
    """Pad the linear weight/bias to a lane-dense width ONCE (not per forward)."""
    C, D = w_t.shape
    Dp = pl.cdiv(D, 128) * 128
    w_pad = jnp.zeros((C, Dp), w_t.dtype).at[:, :D].set(w_t)
    b_pad = jnp.zeros((1, Dp), b.dtype).at[:, :D].set(b.reshape(1, D))
    return w_pad, b_pad


def gat_forward(x, graph, w_pad, b_pad, out_dim, *, target_rows=256):
    """x: [B, N, C] f32, graph: [N, N] f32, w_pad: [C, Dp], b_pad: [1, Dp]."""
    B, N, C = x.shape
    Dp = w_pad.shape[1]
    Bn = B * N

    # Batches per group: largest divisor of B with G*N <= target_rows
    # (target_rows ~256 fills the v6e/v7x MXU; 128 is ideal on v5e).
    candidates = [g for g in range(1, B + 1)
                  if B % g == 0 and g * N <= max(target_rows, N)]
    G = max(candidates)
    R = G * N
    num_groups = B // G

    # Block-diagonal adjacency and cross-batch additive mask, built once per call
    # in the wrapper (cheap XLA ops; reused for every group).
    eye_g = jnp.eye(G, dtype=jnp.float32)
    g_blk = jnp.kron(eye_g, graph.astype(jnp.float32))                    # [R, R]
    xbias = jnp.kron(1.0 - eye_g, jnp.ones((N, N), jnp.float32)) * jnp.float32(-1e30)

    x2d = x.reshape(Bn, C)   # fold batch into the matmul M dimension

    cost = pl.CostEstimate(
        flops=2 * Bn * C * Dp + 4 * Bn * R * Dp,
        transcendentals=Bn * R,
        bytes_accessed=4 * (Bn * C + 2 * R * R + C * Dp + Dp + Bn * Dp),
    )

    grid_spec = pltpu.PrefetchScalarGridSpec(
        num_scalar_prefetch=0,
        grid=(num_groups,),
        in_specs=[
            pl.BlockSpec((R, C), lambda i: (i, 0)),    # rows of group i
            pl.BlockSpec((R, R), lambda i: (0, 0)),    # block-diag graph (shared)
            pl.BlockSpec((R, R), lambda i: (0, 0)),    # cross-batch mask (shared)
            pl.BlockSpec((C, Dp), lambda i: (0, 0)),   # padded W^T (shared)
            pl.BlockSpec((1, Dp), lambda i: (0, 0)),   # padded bias (shared)
        ],
        out_specs=pl.BlockSpec((R, Dp), lambda i: (i, 0)),
    )

    out = pl.pallas_call(
        gat_kernel,
        out_shape=jax.ShapeDtypeStruct((Bn, Dp), x.dtype),
        grid_spec=grid_spec,
        compiler_params=pltpu.CompilerParams(
            dimension_semantics=("parallel",)),        # v7x: shard groups over 2 TCs
        cost_estimate=cost,
    )(x2d, g_blk, xbias, w_pad, b_pad)

    # The [:, :out_dim] slice is a real copy; keep it only because the module's
    # contract is a [B, N, D] output (consumers could read the padded buffer).
    return out[:, :out_dim].reshape(B, N, out_dim)


def gat_reference(x, graph, w_t, b):
    """Pure-JAX mirror of the PyTorch module's forward (full-f32 dots)."""
    hp = lax.Precision.HIGHEST
    h = jnp.einsum("bnc,cd->bnd", x, w_t, precision=hp)
    scores = jnp.einsum("bnd,bmd->bnm", h, h, precision=hp) * graph[None]
    scores = jnp.where(scores == 0.0, -1e16, scores)
    attn = jax.nn.softmax(scores, axis=2)
    return jnp.einsum("bnm,bmd->bnd", attn, h, precision=hp) + b[None, None, :]


if __name__ == "__main__":
    B, N, C, D = 2, 16, 8, 32

    key = jax.random.PRNGKey(0)
    k_x, k_w, k_b, k_g = jax.random.split(key, 4)

    # inputs [B, N, C]
    x = jax.random.normal(k_x, (B, N, C), dtype=jnp.float32)
    # nn.Linear(in_c, out_c, bias=False) weight is [out_c, in_c]; init normal_.
    w_torch_layout = jax.random.normal(k_w, (D, C), dtype=jnp.float32)
    w_t = w_torch_layout.T                          # [C, D]
    # bias parameter b: [out_c], init normal_.
    b = jax.random.normal(k_b, (D,), dtype=jnp.float32)
    # graph adjacency [N, N] with 0/1 entries and self loops (zeros exercise
    # the masked_fill path).
    graph = (jax.random.uniform(k_g, (N, N)) < 0.4).astype(jnp.float32)
    graph = jnp.maximum(graph, jnp.eye(N, dtype=jnp.float32))

    # Pad parameters once, at "init time".
    w_pad, b_pad = prepare_params(w_t, b)

    out = jax.block_until_ready(gat_forward(x, graph, w_pad, b_pad, out_dim=D))

    ref = gat_reference(x, graph, w_t, b)
    assert out.shape == (B, N, D)
    max_err = float(jnp.max(jnp.abs(out - ref)))
    assert jnp.allclose(out, ref, atol=1e-3, rtol=1e-3), (
        f"mismatch vs reference (max abs err = {max_err})")

    print("KERNEL_OK")
</pallas_src>

<mosaic_0001>
module attributes {stable_mosaic.version = 11 : i64} {
  func.func @gat_kernel(%arg0: i32, %arg1: memref<32x8xf32, #tpu.memory_space<vmem>>, %arg2: memref<32x32xf32, #tpu.memory_space<vmem>>, %arg3: memref<32x32xf32, #tpu.memory_space<vmem>>, %arg4: memref<8x128xf32, #tpu.memory_space<vmem>>, %arg5: memref<1x128xf32, #tpu.memory_space<vmem>>, %arg6: memref<32x128xf32, #tpu.memory_space<vmem>>) attributes {dimension_semantics = [#tpu.dimension_semantics<parallel>], iteration_bounds = array<i64: 1>, scalar_prefetch = 0 : i64, scratch_operands = 0 : i64, tpu.core_type = #tpu.core_type<tc>, window_params = [{transform_indices = @transform_0, window_bounds = array<i64: 32, 8>}, {pipeline_mode = #tpu.pipeline_mode<synchronous>, transform_indices = @transform_1, window_bounds = array<i64: 32, 32>}, {pipeline_mode = #tpu.pipeline_mode<synchronous>, transform_indices = @transform_2, window_bounds = array<i64: 32, 32>}, {pipeline_mode = #tpu.pipeline_mode<synchronous>, transform_indices = @transform_3, window_bounds = array<i64: 8, 128>}, {pipeline_mode = #tpu.pipeline_mode<synchronous>, transform_indices = @transform_4, window_bounds = array<i64: 1, 128>}, {transform_indices = @transform_5, window_bounds = array<i64: 32, 128>}]} {
    %c0 = arith.constant 0 : index
    %c0_0 = arith.constant 0 : index
    %0 = vector.load %arg1[%c0, %c0_0] : memref<32x8xf32, #tpu.memory_space<vmem>>, vector<32x8xf32>
    %c0_1 = arith.constant 0 : index
    %c0_2 = arith.constant 0 : index
    %1 = vector.load %arg4[%c0_1, %c0_2] : memref<8x128xf32, #tpu.memory_space<vmem>>, vector<8x128xf32>
    %cst = arith.constant dense<0.000000e+00> : vector<32x128xf32>
    %2 = tpu.matmul %0, %1, %cst {dimension_numbers = #tpu.dot_dimension_numbers<[1], [0], [0], [1], [0, 0, 1, 1], [], []>, precision = #tpu.contract_precision<fp32>} : vector<32x8xf32>, vector<8x128xf32>, vector<32x128xf32> -> vector<32x128xf32>
    %cst_3 = arith.constant dense<0.000000e+00> : vector<32x32xf32>
    %3 = tpu.matmul %2, %2, %cst_3 {dimension_numbers = #tpu.dot_dimension_numbers<[1], [1], [0], [0], [0, 0, 1, 0], [], []>, precision = #tpu.contract_precision<fp32>} : vector<32x128xf32>, vector<32x128xf32>, vector<32x32xf32> -> vector<32x32xf32>
    %c0_4 = arith.constant 0 : index
    %c0_5 = arith.constant 0 : index
    %4 = vector.load %arg2[%c0_4, %c0_5] : memref<32x32xf32, #tpu.memory_space<vmem>>, vector<32x32xf32>
    %5 = arith.mulf %3, %4 : vector<32x32xf32>
    %cst_6 = arith.constant 0.000000e+00 : f32
    %6 = vector.broadcast %cst_6 : f32 to vector<32x32xf32>
    %7 = arith.cmpf oeq, %5, %6 : vector<32x32xf32>
    %cst_7 = arith.constant -1.000000e+16 : f32
    %8 = vector.broadcast %cst_7 : f32 to vector<32x32xf32>
    %9 = arith.select %7, %8, %5 : vector<32x32xi1>, vector<32x32xf32>
    %c0_8 = arith.constant 0 : index
    %c0_9 = arith.constant 0 : index
    %10 = vector.load %arg3[%c0_8, %c0_9] : memref<32x32xf32, #tpu.memory_space<vmem>>, vector<32x32xf32>
    %11 = arith.addf %9, %10 : vector<32x32xf32>
    %cst_10 = arith.constant dense<0xFF800000> : vector<32xf32>
    %12 = vector.multi_reduction <maximumf>, %11, %cst_10 [1] : vector<32x32xf32> to vector<32xf32>
    %13 = vector.shape_cast %12 : vector<32xf32> to vector<32x1xf32>
    %14 = vector.broadcast %13 : vector<32x1xf32> to vector<32x32xf32>
    %15 = arith.subf %11, %14 : vector<32x32xf32>
    %16 = math.exp %15 : vector<32x32xf32>
    %cst_11 = arith.constant dense<0.000000e+00> : vector<32xf32>
    %17 = vector.multi_reduction <add>, %16, %cst_11 [1] : vector<32x32xf32> to vector<32xf32>
    %18 = vector.shape_cast %17 : vector<32xf32> to vector<32x1xf32>
    %19 = vector.broadcast %18 : vector<32x1xf32> to vector<32x32xf32>
    %20 = arith.divf %16, %19 : vector<32x32xf32>
    %cst_12 = arith.constant dense<0.000000e+00> : vector<32x128xf32>
    %21 = tpu.matmul %20, %2, %cst_12 {dimension_numbers = #tpu.dot_dimension_numbers<[1], [0], [0], [1], [0, 0, 1, 1], [], []>, precision = #tpu.contract_precision<fp32>} : vector<32x32xf32>, vector<32x128xf32>, vector<32x128xf32> -> vector<32x128xf32>
    %c0_13 = arith.constant 0 : index
    %c0_14 = arith.constant 0 : index
    %22 = vector.load %arg5[%c0_13, %c0_14] : memref<1x128xf32, #tpu.memory_space<vmem>>, vector<1x128xf32>
    %23 = vector.broadcast %22 : vector<1x128xf32> to vector<32x128xf32>
    %24 = arith.addf %21, %23 : vector<32x128xf32>
    %c0_15 = arith.constant 0 : index
    %c0_16 = arith.constant 0 : index
    %25 = vector.load %arg6[%c0_15, %c0_16] : memref<32x128xf32, #tpu.memory_space<vmem>>, vector<32x128xf32>
    tpu.vector_store %arg6[%c0_15, %c0_16], %24 {strides = array<i32>} : memref<32x128xf32, #tpu.memory_space<vmem>>, vector<32x128xf32>,
    return
  }
  func.func @transform_0(%arg0: i32) -> (i32, i32) {
    %c0_i32 = arith.constant 0 : i32
    %c0_i32_0 = arith.constant 0 : i32
    return %arg0, %c0_i32 : i32, i32
  }
  func.func @transform_1(%arg0: i32) -> (i32, i32) {
    %c0_i32 = arith.constant 0 : i32
    %c0_i32_0 = arith.constant 0 : i32
    %c0_i32_1 = arith.constant 0 : i32
    return %c0_i32, %c0_i32_0 : i32, i32
  }
  func.func @transform_2(%arg0: i32) -> (i32, i32) {
    %c0_i32 = arith.constant 0 : i32
    %c0_i32_0 = arith.constant 0 : i32
    %c0_i32_1 = arith.constant 0 : i32
    return %c0_i32, %c0_i32_0 : i32, i32
  }
  func.func @transform_3(%arg0: i32) -> (i32, i32) {
    %c0_i32 = arith.constant 0 : i32
    %c0_i32_0 = arith.constant 0 : i32
    %c0_i32_1 = arith.constant 0 : i32
    return %c0_i32, %c0_i32_0 : i32, i32
  }
  func.func @transform_4(%arg0: i32) -> (i32, i32) {
    %c0_i32 = arith.constant 0 : i32
    %c0_i32_0 = arith.constant 0 : i32
    %c0_i32_1 = arith.constant 0 : i32
    return %c0_i32, %c0_i32_0 : i32, i32
  }
  func.func @transform_5(%arg0: i32) -> (i32, i32) {
    %c0_i32 = arith.constant 0 : i32
    %c0_i32_0 = arith.constant 0 : i32
    return %arg0, %c0_i32 : i32, i32
  }
}

</mosaic_0001>

<llo_original>
// kernel: tpu_custom_call.1
$region0: #{tpu_custom_call.1}
  #allocation0 [shape = 'u32[]', space=smem, size = 0x4, offset = 0x4, fixed_abs, tag = 'smem constant byte address 0x4 - core index']
  #allocation1 [shape = 'u32[144,128]{1,0:T(1,128)}', space=vmem, size = 0x12000, scoped, tag = 'internal scratch']
  %s0 = inlined_call_operand.vmem [shape: f32[32,8], index: 0, kind: input, shape index: {}]
  %s1 = inlined_call_operand.vmem [shape: f32[32,32], index: 1, kind: input, shape index: {}]
  %s2 = inlined_call_operand.hbm [shape: f32[32,32], index: 2, kind: input, shape index: {}]
  %s3 = inlined_call_operand.vmem [shape: f32[8,128], index: 3, kind: input, shape index: {}]
  %s4 = inlined_call_operand.vmem [shape: f32[1,128], index: 4, kind: input, shape index: {}]
  %s5 = inlined_call_operand.hbm [shape: f32[32,128], index: 5, kind: output, shape index: {}]
  %s6 = sld [smem:[#allocation0]]
  $region34: #{tpu_custom_call.1} parent=0
    _
  %s8 = ssub.s32 1, %s6
  %s9 = scalar_select 0, %s8, %s6
  $region1: #{tpu_custom_call.1} parent=0
    #allocation2 [shape = 'u8[16384]{0}', space=vmem, size = 0x4000, scoped, tag = 'input window, operand 2, single buffered']
    #allocation3 [shape = 's32[1]{0}', space=sflag, size = 0x4, scoped, tag = 'scoped memory for tpu_custom_call.1']
    #allocation4 [shape = 's32[1]{0}', space=sflag, size = 0x4, scoped, tag = 'scoped memory for tpu_custom_call.1']
    #allocation5 [shape = 'u8[16384]{0}', space=vmem, size = 0x4000, scoped, tag = 'output window, operand 0, single buffered']
    %10 = vsyncpa [#allocation3], 0
    %11 = vsyncpa [#allocation4], 0
    // Predicated region
    $region2: #{tpu_custom_call.1} parent=1 // pred_check
      _
    $region3: #{tpu_custom_call.1} parent=1 // pred_check_branch
      %13 = sbr.rel (0) target = $region5
    $region4: #{tpu_custom_call.1} parent=1 // pred_region
      _
    $region5: #{tpu_custom_call.1} parent=1 // pred_fallthru
      _
    // Predicated region
    $region6: #{tpu_custom_call.1} parent=1 // pred_check
      _
    $region7: #{tpu_custom_call.1} parent=1 // pred_check_branch
      %15 = sbr.rel (0) target = $region9
    $region8: #{tpu_custom_call.1} parent=1 // pred_region
      _
    $region9: #{tpu_custom_call.1} parent=1 // pred_fallthru
      _
    // Predicated region
    $region10: #{tpu_custom_call.1} parent=1 // pred_check
      _
    $region11: #{tpu_custom_call.1} parent=1 // pred_check_branch
      %17 = sbr.rel (0) target = $region13
    $region12: #{tpu_custom_call.1} parent=1 // pred_region
      %s19 = ssub.s32 512, 512
      %20 = vsyncadd [#allocation3], %s19
      %s21 = sshll.u32 [#allocation2], 4
      %s22 = int_to_ptr.vmem [resolvable:$true] %s21
      %27 = dma.hbm_to_vmem [thread:$0]  %s2, 512, %s22, [#allocation3], 128, 128, 8
    $region13: #{tpu_custom_call.1} parent=1 // pred_fallthru
      _
    // Predicated region
    $region14: #{tpu_custom_call.1} parent=1 // pred_check
      _
    $region15: #{tpu_custom_call.1} parent=1 // pred_check_branch
      %29 = sbr.rel (0) target = $region17
    $region16: #{tpu_custom_call.1} parent=1 // pred_region
      _
    $region17: #{tpu_custom_call.1} parent=1 // pred_fallthru
      _
    // Predicated region
    $region18: #{tpu_custom_call.1} parent=1 // pred_check
      _
    $region19: #{tpu_custom_call.1} parent=1 // pred_check_branch
      %31 = sbr.rel (0) target = $region21
    $region20: #{tpu_custom_call.1} parent=1 // pred_region
      _
    $region21: #{tpu_custom_call.1} parent=1 // pred_fallthru
      _
    // Predicated region
    $region22: #{tpu_custom_call.1} parent=1 // pred_check
      _
    $region23: #{tpu_custom_call.1} parent=1 // pred_check_branch
      %33 = sbr.rel (0) target = $region25
    $region24: #{tpu_custom_call.1} parent=1 // pred_region
      %34 = dma.done [#allocation3], 512
    $region25: #{tpu_custom_call.1} parent=1 // pred_fallthru
      _
    %v35 = vld [vmem:[%s0] sm:$0xff]
    %v36 = vld [vmem:[%s0 + $0x8] sm:$0xff]
    %v37 = vld [vmem:[%s0 + $0x10] sm:$0xff]
    %v38 = vld [vmem:[%s0 + $0x18] sm:$0xff]
    %v39 = vld [vmem:[%s3] sm:$0xff]
    %vm40 = vcmask 64512
    %v42 = vsel %vm40, %v35, 0
    %v45 = vsel %vm40, %v36, 0
    %v48 = vsel %vm40, %v37, 0
    %v51 = vsel %vm40, %v38, 0
    %53 = vmatprep.subr.mxu0 0.0
    %v54 = vand.u32 %v39, 4294901760
    %55 = vmatpush1.msra.mxu0 %v54
    %56 = vmatprep.subr.mxu0 0.0
    %57 = vmatpush1.msra.mxu0 0.0
    %58 = vmatprep.subr.mxu0 0.0
    %59 = vmatpush1.msra.mxu0 0.0
    %60 = vmatprep.subr.mxu0 0.0
    %61 = vmatpush1.msra.mxu0 0.0
    %62 = vmatprep.subr.mxu0 0.0
    %63 = vmatpush1.msra.mxu0 0.0
    %64 = vmatprep.subr.mxu0 0.0
    %65 = vmatpush1.msra.mxu0 0.0
    %66 = vmatprep.subr.mxu0 0.0
    %67 = vmatpush1.msra.mxu0 0.0
    %68 = vmatprep.subr.mxu0 0.0
    %69 = vmatpush1.msra.mxu0 0.0
    %70 = vmatprep.subr.mxu0 0.0
    %71 = vmatpush1.msra.mxu0 0.0
    %72 = vmatprep.subr.mxu0 0.0
    %73 = vmatpush1.msra.mxu0 0.0
    %74 = vmatprep.subr.mxu0 0.0
    %75 = vmatpush1.msra.mxu0 0.0
    %76 = vmatprep.subr.mxu0 0.0
    %77 = vmatpush1.msra.mxu0 0.0
    %78 = vmatprep.subr.mxu0 0.0
    %79 = vmatpush1.msra.mxu0 0.0
    %80 = vmatprep.subr.mxu0 0.0
    %81 = vmatpush1.msra.mxu0 0.0
    %82 = vmatprep.subr.mxu0 0.0
    %83 = vmatpush1.msra.mxu0 0.0
    %84 = vmatprep.subr.mxu0 0.0
    %85 = vmatpush1.msra.mxu0 0.0
    %86 = vmatprep.subr.mxu0 0.0
    %87 = vmatpush1.msra.mxu0 0.0
    %88 = vmatprep.subr.mxu0 0.0
    %89 = vmatpush1.msra.mxu0 0.0
    %90 = vmatprep.subr.mxu0 0.0
    %91 = vmatpush1.msra.mxu0 0.0
    %92 = vmatprep.subr.mxu0 0.0
    %93 = vmatpush1.msra.mxu0 0.0
    %94 = vmatprep.subr.mxu0 0.0
    %95 = vmatpush1.msra.mxu0 0.0
    %96 = vmatprep.subr.mxu0 0.0
    %97 = vmatpush1.msra.mxu0 0.0
    %98 = vmatprep.subr.mxu0 0.0
    %99 = vmatpush1.msra.mxu0 0.0
    %100 = vmatprep.subr.mxu0 0.0
    %101 = vmatpush1.msra.mxu0 0.0
    %102 = vmatprep.subr.mxu0 0.0
    %103 = vmatpush1.msra.mxu0 0.0
    %104 = vmatprep.subr.mxu0 0.0
    %105 = vmatpush1.msra.mxu0 0.0
    %106 = vmatprep.subr.mxu0 0.0
    %107 = vmatpush1.msra.mxu0 0.0
    %108 = vmatprep.subr.mxu0 0.0
    %109 = vmatpush1.msra.mxu0 0.0
    %110 = vmatprep.subr.mxu0 0.0
    %111 = vmatpush1.msra.mxu0 0.0
    %112 = vmatprep.subr.mxu0 0.0
    %113 = vmatpush1.msra.mxu0 0.0
    %114 = vmatprep.subr.mxu0 0.0
    %115 = vmatpush1.msra.mxu0 0.0
    %116 = vmatprep.subr.mxu0 0.0
    %117 = vmatpush1.msra.mxu0 0.0
    %118 = vmatprep.mubr.f32.mxu0 0.0
    %v119 = vand.u32 %v42, 4294901760
    %v120 = vsub.f32 %v42, %v119
    %v121 = vand.u32 %v120, 4294901760
    %v122 = vsub.f32 %v120, %v121
    %v123 = vand.u32 %v122, 4294901760
    %124 = vmatmul.mubr.f32.gmra.mrb[0].mxu0 %v123
    %v125 = vpop.f32.mrb[0].mxu0
    %v126 = vadd.f32 0.0, %v125
    %v127 = vpop.f32.mrb[0].mxu0
    %128 = vmatprep.mubr.f32.mxu0 0.0
    %v129 = vand.u32 %v45, 4294901760
    %v130 = vsub.f32 %v45, %v129
    %v131 = vand.u32 %v130, 4294901760
    %v132 = vsub.f32 %v130, %v131
    %v133 = vand.u32 %v132, 4294901760
    %134 = vmatmul.mubr.f32.gmra.mrb[0].mxu0 %v133
    %v135 = vpop.f32.mrb[0].mxu0
    %v136 = vadd.f32 0.0, %v135
    %v137 = vpop.f32.mrb[0].mxu0
    %138 = vmatprep.mubr.f32.mxu0 0.0
    %v139 = vand.u32 %v48, 4294901760
    %v140 = vsub.f32 %v48, %v139
    %v141 = vand.u32 %v140, 4294901760
    %v142 = vsub.f32 %v140, %v141
    %v143 = vand.u32 %v142, 4294901760
    %144 = vmatmul.mubr.f32.gmra.mrb[0].mxu0 %v143
    %v145 = vpop.f32.mrb[0].mxu0
    %v146 = vadd.f32 0.0, %v145
    %v147 = vpop.f32.mrb[0].mxu0
    %148 = vmatprep.mubr.f32.mxu0 0.0
    %v149 = vand.u32 %v51, 4294901760
    %v150 = vsub.f32 %v51, %v149
    %v151 = vand.u32 %v150, 4294901760
    %v152 = vsub.f32 %v150, %v151
    %v153 = vand.u32 %v152, 4294901760
    %154 = vmatmul.mubr.f32.gmra.mrb[0].mxu0 %v153
    %v155 = vpop.f32.mrb[0].mxu0
    %v156 = vadd.f32 0.0, %v155
    %v157 = vpop.f32.mrb[0].mxu0
    %158 = vdwg.mxu0
    %159 = vmatprep.subr.mxu0 0.0
    %v160 = vand.u32 %v39, 4294901760
    %v161 = vsub.f32 %v39, %v160
    %v162 = vand.u32 %v161, 4294901760
    %v163 = vsub.f32 %v161, %v162
    %v164 = vand.u32 %v163, 4294901760
    %165 = vmatpush1.msra.mxu0 %v164
    %166 = vmatprep.subr.mxu0 0.0
    %167 = vmatpush1.msra.mxu0 0.0
    %168 = vmatprep.subr.mxu0 0.0
    %169 = vmatpush1.msra.mxu0 0.0
    %170 = vmatprep.subr.mxu0 0.0
    %171 = vmatpush1.msra.mxu0 0.0
    %172 = vmatprep.subr.mxu0 0.0
    %173 = vmatpush1.msra.mxu0 0.0
    %174 = vmatprep.subr.mxu0 0.0
    %175 = vmatpush1.msra.mxu0 0.0
    %176 = vmatprep.subr.mxu0 0.0
    %177 = vmatpush1.msra.mxu0 0.0
    %178 = vmatprep.subr.mxu0 0.0
    %179 = vmatpush1.msra.mxu0 0.0
    %180 = vmatprep.subr.mxu0 0.0
    %181 = vmatpush1.msra.mxu0 0.0
    %182 = vmatprep.subr.mxu0 0.0
    %183 = vmatpush1.msra.mxu0 0.0
    %184 = vmatprep.subr.mxu0 0.0
    %185 = vmatpush1.msra.mxu0 0.0
    %186 = vmatprep.subr.mxu0 0.0
    %187 = vmatpush1.msra.mxu0 0.0
    %188 = vmatprep.subr.mxu0 0.0
    %189 = vmatpush1.msra.mxu0 0.0
    %190 = vmatprep.subr.mxu0 0.0
    %191 = vmatpush1.msra.mxu0 0.0
    %192 = vmatprep.subr.mxu0 0.0
    %193 = vmatpush1.msra.mxu0 0.0
    %194 = vmatprep.subr.mxu0 0.0
    %195 = vmatpush1.msra.mxu0 0.0
    %196 = vmatprep.subr.mxu0 0.0
    %197 = vmatpush1.msra.mxu0 0.0
    %198 = vmatprep.subr.mxu0 0.0
    %199 = vmatpush1.msra.mxu0 0.0
    %200 = vmatprep.subr.mxu0 0.0
    %201 = vmatpush1.msra.mxu0 0.0
    %202 = vmatprep.subr.mxu0 0.0
    %203 = vmatpush1.msra.mxu0 0.0
    %204 = vmatprep.subr.mxu0 0.0
    %205 = vmatpush1.msra.mxu0 0.0
    %206 = vmatprep.subr.mxu0 0.0
    %207 = vmatpush1.msra.mxu0 0.0
    %208 = vmatprep.subr.mxu0 0.0
    %209 = vmatpush1.msra.mxu0 0.0
    %210 = vmatprep.subr.mxu0 0.0
    %211 = vmatpush1.msra.mxu0 0.0
    %212 = vmatprep.subr.mxu0 0.0
    %213 = vmatpush1.msra.mxu0 0.0
    %214 = vmatprep.subr.mxu0 0.0
    %215 = vmatpush1.msra.mxu0 0.0
    %216 = vmatprep.subr.mxu0 0.0
    %217 = vmatpush1.msra.mxu0 0.0
    %218 = vmatprep.subr.mxu0 0.0
    %219 = vmatpush1.msra.mxu0 0.0
    %220 = vmatprep.subr.mxu0 0.0
    %221 = vmatpush1.msra.mxu0 0.0
    %222 = vmatprep.subr.mxu0 0.0
    %223 = vmatpush1.msra.mxu0 0.0
    %224 = vmatprep.subr.mxu0 0.0
    %225 = vmatpush1.msra.mxu0 0.0
    %226 = vmatprep.subr.mxu0 0.0
    %227 = vmatpush1.msra.mxu0 0.0
    %228 = vmatprep.mubr.f32.mxu0 0.0
    %v229 = vand.u32 %v42, 4294901760
    %230 = vmatmul.mubr.f32.gmra.mrb[0].mxu0 %v229
    %v231 = vpop.f32.mrb[0].mxu0
    %v232 = vadd.f32 %v126, %v231
    %v233 = vpop.f32.mrb[0].mxu0
    %234 = vmatprep.mubr.f32.mxu0 0.0
    %v235 = vand.u32 %v45, 4294901760
    %236 = vmatmul.mubr.f32.gmra.mrb[0].mxu0 %v235
    %v237 = vpop.f32.mrb[0].mxu0
    %v238 = vadd.f32 %v136, %v237
    %v239 = vpop.f32.mrb[0].mxu0
    %240 = vmatprep.mubr.f32.mxu0 0.0
    %v241 = vand.u32 %v48, 4294901760
    %242 = vmatmul.mubr.f32.gmra.mrb[0].mxu0 %v241
    %v243 = vpop.f32.mrb[0].mxu0
    %v244 = vadd.f32 %v146, %v243
    %v245 = vpop.f32.mrb[0].mxu0
    %246 = vmatprep.mubr.f32.mxu0 0.0
    %v247 = vand.u32 %v51, 4294901760
    %248 = vmatmul.mubr.f32.gmra.mrb[0].mxu0 %v247
    %v249 = vpop.f32.mrb[0].mxu0
    %v250 = vadd.f32 %v156, %v249
    %v251 = vpop.f32.mrb[0].mxu0
    %252 = vdwg.mxu0
    %253 = vmatprep.subr.mxu0 0.0
    %v254 = vand.u32 %v39, 4294901760
    %v255 = vsub.f32 %v39, %v254
    %256 = vmatpush1.msra.mxu0 %v255
    %257 = vmatprep.subr.mxu0 0.0
    %258 = vmatpush1.msra.mxu0 0.0
    %259 = vmatprep.subr.mxu0 0.0
    %260 = vmatpush1.msra.mxu0 0.0
    %261 = vmatprep.subr.mxu0 0.0
    %262 = vmatpush1.msra.mxu0 0.0
    %263 = vmatprep.subr.mxu0 0.0
    %264 = vmatpush1.msra.mxu0 0.0
    %265 = vmatprep.subr.mxu0 0.0
    %266 = vmatpush1.msra.mxu0 0.0
    %267 = vmatprep.subr.mxu0 0.0
    %268 = vmatpush1.msra.mxu0 0.0
    %269 = vmatprep.subr.mxu0 0.0
    %270 = vmatpush1.msra.mxu0 0.0
    %271 = vmatprep.subr.mxu0 0.0
    %272 = vmatpush1.msra.mxu0 0.0
    %273 = vmatprep.subr.mxu0 0.0
    %274 = vmatpush1.msra.mxu0 0.0
    %275 = vmatprep.subr.mxu0 0.0
    %276 = vmatpush1.msra.mxu0 0.0
    %277 = vmatprep.subr.mxu0 0.0
    %278 = vmatpush1.msra.mxu0 0.0
    %279 = vmatprep.subr.mxu0 0.0
    %280 = vmatpush1.msra.mxu0 0.0
    %281 = vmatprep.subr.mxu0 0.0
    %282 = vmatpush1.msra.mxu0 0.0
    %283 = vmatprep.subr.mxu0 0.0
    %284 = vmatpush1.msra.mxu0 0.0
    %285 = vmatprep.subr.mxu0 0.0
    %286 = vmatpush1.msra.mxu0 0.0
    %287 = vmatprep.subr.mxu0 0.0
    %288 = vmatpush1.msra.mxu0 0.0
    %289 = vmatprep.subr.mxu0 0.0
    %290 = vmatpush1.msra.mxu0 0.0
    %291 = vmatprep.subr.mxu0 0.0
    %292 = vmatpush1.msra.mxu0 0.0
    %293 = vmatprep.subr.mxu0 0.0
    %294 = vmatpush1.msra.mxu0 0.0
    %295 = vmatprep.subr.mxu0 0.0
    %296 = vmatpush1.msra.mxu0 0.0
    %297 = vmatprep.subr.mxu0 0.0
    %298 = vmatpush1.msra.mxu0 0.0
    %299 = vmatprep.subr.mxu0 0.0
    %300 = vmatpush1.msra.mxu0 0.0
    %301 = vmatprep.subr.mxu0 0.0
    %302 = vmatpush1.msra.mxu0 0.0
    %303 = vmatprep.subr.mxu0 0.0
    %304 = vmatpush1.msra.mxu0 0.0
    %305 = vmatprep.subr.mxu0 0.0
    %306 = vmatpush1.msra.mxu0 0.0
    %307 = vmatprep.subr.mxu0 0.0
    %308 = vmatpush1.msra.mxu0 0.0
    %309 = vmatprep.subr.mxu0 0.0
    %310 = vmatpush1.msra.mxu0 0.0
    %311 = vmatprep.subr.mxu0 0.0
    %312 = vmatpush1.msra.mxu0 0.0
    %313 = vmatprep.subr.mxu0 0.0
    %314 = vmatpush1.msra.mxu0 0.0
    %315 = vmatprep.subr.mxu0 0.0
    %316 = vmatpush1.msra.mxu0 0.0
    %317 = vmatprep.subr.mxu0 0.0
    %318 = vmatpush1.msra.mxu0 0.0
    %319 = vmatprep.mubr.f32.mxu0 0.0
    %v320 = vand.u32 %v42, 4294901760
    %v321 = vsub.f32 %v42, %v320
    %322 = vmatmul.mubr.f32.gmra.mrb[0].mxu0 %v321
    %v323 = vpop.f32.mrb[0].mxu0
    %v324 = vadd.f32 %v232, %v323
    %v325 = vpop.f32.mrb[0].mxu0
    %326 = vmatprep.mubr.f32.mxu0 0.0
    %v327 = vand.u32 %v45, 4294901760
    %v328 = vsub.f32 %v45, %v327
    %329 = vmatmul.mubr.f32.gmra.mrb[0].mxu0 %v328
    %v330 = vpop.f32.mrb[0].mxu0
    %v331 = vadd.f32 %v238, %v330
    %v332 = vpop.f32.mrb[0].mxu0
    %333 = vmatprep.mubr.f32.mxu0 0.0
    %v334 = vand.u32 %v48, 4294901760
    %v335 = vsub.f32 %v48, %v334
    %336 = vmatmul.mubr.f32.gmra.mrb[0].mxu0 %v335
    %v337 = vpop.f32.mrb[0].mxu0
    %v338 = vadd.f32 %v244, %v337
    %v339 = vpop.f32.mrb[0].mxu0
    %340 = vmatprep.mubr.f32.mxu0 0.0
    %v341 = vand.u32 %v51, 4294901760
    %v342 = vsub.f32 %v51, %v341
    %343 = vmatmul.mubr.f32.gmra.mrb[0].mxu0 %v342
    %v344 = vpop.f32.mrb[0].mxu0
    %v345 = vadd.f32 %v250, %v344
    %v346 = vpop.f32.mrb[0].mxu0
    %347 = vdwg.mxu0
    %348 = vmatprep.subr.mxu0 0.0
    %v349 = vand.u32 %v39, 4294901760
    %350 = vmatpush1.msra.mxu0 %v349
    %351 = vmatprep.subr.mxu0 0.0
    %352 = vmatpush1.msra.mxu0 0.0
    %353 = vmatprep.subr.mxu0 0.0
    %354 = vmatpush1.msra.mxu0 0.0
    %355 = vmatprep.subr.mxu0 0.0
    %356 = vmatpush1.msra.mxu0 0.0
    %357 = vmatprep.subr.mxu0 0.0
    %358 = vmatpush1.msra.mxu0 0.0
    %359 = vmatprep.subr.mxu0 0.0
    %360 = vmatpush1.msra.mxu0 0.0
    %361 = vmatprep.subr.mxu0 0.0
    %362 = vmatpush1.msra.mxu0 0.0
    %363 = vmatprep.subr.mxu0 0.0
    %364 = vmatpush1.msra.mxu0 0.0
    %365 = vmatprep.subr.mxu0 0.0
    %366 = vmatpush1.msra.mxu0 0.0
    %367 = vmatprep.subr.mxu0 0.0
    %368 = vmatpush1.msra.mxu0 0.0
    %369 = vmatprep.subr.mxu0 0.0
    %370 = vmatpush1.msra.mxu0 0.0
    %371 = vmatprep.subr.mxu0 0.0
    %372 = vmatpush1.msra.mxu0 0.0
    %373 = vmatprep.subr.mxu0 0.0
    %374 = vmatpush1.msra.mxu0 0.0
    %375 = vmatprep.subr.mxu0 0.0
    %376 = vmatpush1.msra.mxu0 0.0
    %377 = vmatprep.subr.mxu0 0.0
    %378 = vmatpush1.msra.mxu0 0.0
    %379 = vmatprep.subr.mxu0 0.0
    %380 = vmatpush1.msra.mxu0 0.0
    %381 = vmatprep.subr.mxu0 0.0
    %382 = vmatpush1.msra.mxu0 0.0
    %383 = vmatprep.subr.mxu0 0.0
    %384 = vmatpush1.msra.mxu0 0.0
    %385 = vmatprep.subr.mxu0 0.0
    %386 = vmatpush1.msra.mxu0 0.0
    %387 = vmatprep.subr.mxu0 0.0
    %388 = vmatpush1.msra.mxu0 0.0
    %389 = vmatprep.subr.mxu0 0.0
    %390 = vmatpush1.msra.mxu0 0.0
    %391 = vmatprep.subr.mxu0 0.0
    %392 = vmatpush1.msra.mxu0 0.0
    %393 = vmatprep.subr.mxu0 0.0
    %394 = vmatpush1.msra.mxu0 0.0
    %395 = vmatprep.subr.mxu0 0.0
    %396 = vmatpush1.msra.mxu0 0.0
    %397 = vmatprep.subr.mxu0 0.0
    %398 = vmatpush1.msra.mxu0 0.0
    %399 = vmatprep.subr.mxu0 0.0
    %400 = vmatpush1.msra.mxu0 0.0
    %401 = vmatprep.subr.mxu0 0.0
    %402 = vmatpush1.msra.mxu0 0.0
    %403 = vmatprep.subr.mxu0 0.0
    %404 = vmatpush1.msra.mxu0 0.0
    %405 = vmatprep.subr.mxu0 0.0
    %406 = vmatpush1.msra.mxu0 0.0
    %407 = vmatprep.subr.mxu0 0.0
    %408 = vmatpush1.msra.mxu0 0.0
    %409 = vmatprep.subr.mxu0 0.0
    %410 = vmatpush1.msra.mxu0 0.0
    %411 = vmatprep.subr.mxu0 0.0
    %412 = vmatpush1.msra.mxu0 0.0
    %413 = vmatprep.mubr.f32.mxu0 0.0
    %v414 = vand.u32 %v42, 4294901760
    %v415 = vsub.f32 %v42, %v414
    %v416 = vand.u32 %v415, 4294901760
    %417 = vmatmul.mubr.f32.gmra.mrb[0].mxu0 %v416
    %v418 = vpop.f32.mrb[0].mxu0
    %v419 = vadd.f32 %v324, %v418
    %v420 = vpop.f32.mrb[0].mxu0
    %421 = vmatprep.mubr.f32.mxu0 0.0
    %v422 = vand.u32 %v45, 4294901760
    %v423 = vsub.f32 %v45, %v422
    %v424 = vand.u32 %v423, 4294901760
    %425 = vmatmul.mubr.f32.gmra.mrb[0].mxu0 %v424
    %v426 = vpop.f32.mrb[0].mxu0
    %v427 = vadd.f32 %v331, %v426
    %v428 = vpop.f32.mrb[0].mxu0
    %429 = vmatprep.mubr.f32.mxu0 0.0
    %v430 = vand.u32 %v48, 4294901760
    %v431 = vsub.f32 %v48, %v430
    %v432 = vand.u32 %v431, 4294901760
    %433 = vmatmul.mubr.f32.gmra.mrb[0].mxu0 %v432
    %v434 = vpop.f32.mrb[0].mxu0
    %v435 = vadd.f32 %v338, %v434
    %v436 = vpop.f32.mrb[0].mxu0
    %437 = vmatprep.mubr.f32.mxu0 0.0
    %v438 = vand.u32 %v51, 4294901760
    %v439 = vsub.f32 %v51, %v438
    %v440 = vand.u32 %v439, 4294901760
    %441 = vmatmul.mubr.f32.gmra.mrb[0].mxu0 %v440
    %v442 = vpop.f32.mrb[0].mxu0
    %v443 = vadd.f32 %v345, %v442
    %v444 = vpop.f32.mrb[0].mxu0
    %445 = vdwg.mxu0
    %446 = vmatprep.subr.mxu0 0.0
    %v447 = vand.u32 %v39, 4294901760
    %v448 = vsub.f32 %v39, %v447
    %v449 = vand.u32 %v448, 4294901760
    %450 = vmatpush1.msra.mxu0 %v449
    %451 = vmatprep.subr.mxu0 0.0
    %452 = vmatpush1.msra.mxu0 0.0
    %453 = vmatprep.subr.mxu0 0.0
    %454 = vmatpush1.msra.mxu0 0.0
    %455 = vmatprep.subr.mxu0 0.0
    %456 = vmatpush1.msra.mxu0 0.0
    %457 = vmatprep.subr.mxu0 0.0
    %458 = vmatpush1.msra.mxu0 0.0
    %459 = vmatprep.subr.mxu0 0.0
    %460 = vmatpush1.msra.mxu0 0.0
    %461 = vmatprep.subr.mxu0 0.0
    %462 = vmatpush1.msra.mxu0 0.0
    %463 = vmatprep.subr.mxu0 0.0
    %464 = vmatpush1.msra.mxu0 0.0
    %465 = vmatprep.subr.mxu0 0.0
    %466 = vmatpush1.msra.mxu0 0.0
    %467 = vmatprep.subr.mxu0 0.0
    %468 = vmatpush1.msra.mxu0 0.0
    %469 = vmatprep.subr.mxu0 0.0
    %470 = vmatpush1.msra.mxu0 0.0
    %471 = vmatprep.subr.mxu0 0.0
    %472 = vmatpush1.msra.mxu0 0.0
    %473 = vmatprep.subr.mxu0 0.0
    %474 = vmatpush1.msra.mxu0 0.0
    %475 = vmatprep.subr.mxu0 0.0
    %476 = vmatpush1.msra.mxu0 0.0
    %477 = vmatprep.subr.mxu0 0.0
    %478 = vmatpush1.msra.mxu0 0.0
    %479 = vmatprep.subr.mxu0 0.0
    %480 = vmatpush1.msra.mxu0 0.0
    %481 = vmatprep.subr.mxu0 0.0
    %482 = vmatpush1.msra.mxu0 0.0
    %483 = vmatprep.subr.mxu0 0.0
    %484 = vmatpush1.msra.mxu0 0.0
    %485 = vmatprep.subr.mxu0 0.0
    %486 = vmatpush1.msra.mxu0 0.0
    %487 = vmatprep.subr.mxu0 0.0
    %488 = vmatpush1.msra.mxu0 0.0
    %489 = vmatprep.subr.mxu0 0.0
    %490 = vmatpush1.msra.mxu0 0.0
    %491 = vmatprep.subr.mxu0 0.0
    %492 = vmatpush1.msra.mxu0 0.0
    %493 = vmatprep.subr.mxu0 0.0
    %494 = vmatpush1.msra.mxu0 0.0
    %495 = vmatprep.subr.mxu0 0.0
    %496 = vmatpush1.msra.mxu0 0.0
    %497 = vmatprep.subr.mxu0 0.0
    %498 = vmatpush1.msra.mxu0 0.0
    %499 = vmatprep.subr.mxu0 0.0
    %500 = vmatpush1.msra.mxu0 0.0
    %501 = vmatprep.subr.mxu0 0.0
    %502 = vmatpush1.msra.mxu0 0.0
    %503 = vmatprep.subr.mxu0 0.0
    %504 = vmatpush1.msra.mxu0 0.0
    %505 = vmatprep.subr.mxu0 0.0
    %506 = vmatpush1.msra.mxu0 0.0
    %507 = vmatprep.subr.mxu0 0.0
    %508 = vmatpush1.msra.mxu0 0.0
    %509 = vmatprep.subr.mxu0 0.0
    %510 = vmatpush1.msra.mxu0 0.0
    %511 = vmatprep.subr.mxu0 0.0
    %512 = vmatpush1.msra.mxu0 0.0
    %513 = vmatprep.mubr.f32.mxu0 0.0
    %v514 = vand.u32 %v42, 4294901760
    %515 = vmatmul.mubr.f32.gmra.mrb[0].mxu0 %v514
    %v516 = vpop.f32.mrb[0].mxu0
    %v517 = vadd.f32 %v419, %v516
    %v518 = vpop.f32.mrb[0].mxu0
    %519 = vmatprep.mubr.f32.mxu0 0.0
    %v520 = vand.u32 %v45, 4294901760
    %521 = vmatmul.mubr.f32.gmra.mrb[0].mxu0 %v520
    %v522 = vpop.f32.mrb[0].mxu0
    %v523 = vadd.f32 %v427, %v522
    %v524 = vpop.f32.mrb[0].mxu0
    %525 = vmatprep.mubr.f32.mxu0 0.0
    %v526 = vand.u32 %v48, 4294901760
    %527 = vmatmul.mubr.f32.gmra.mrb[0].mxu0 %v526
    %v528 = vpop.f32.mrb[0].mxu0
    %v529 = vadd.f32 %v435, %v528
    %v530 = vpop.f32.mrb[0].mxu0
    %531 = vmatprep.mubr.f32.mxu0 0.0
    %v532 = vand.u32 %v51, 4294901760
    %533 = vmatmul.mubr.f32.gmra.mrb[0].mxu0 %v532
    %v534 = vpop.f32.mrb[0].mxu0
    %v535 = vadd.f32 %v443, %v534
    %v536 = vpop.f32.mrb[0].mxu0
    %537 = vdwg.mxu0
    %538 = vmatprep.subr.mxu0 0.0
    %v539 = vand.u32 %v39, 4294901760
    %540 = vmatpush1.msra.mxu0 %v539
    %541 = vmatprep.subr.mxu0 0.0
    %542 = vmatpush1.msra.mxu0 0.0
    %543 = vmatprep.subr.mxu0 0.0
    %544 = vmatpush1.msra.mxu0 0.0
    %545 = vmatprep.subr.mxu0 0.0
    %546 = vmatpush1.msra.mxu0 0.0
    %547 = vmatprep.subr.mxu0 0.0
    %548 = vmatpush1.msra.mxu0 0.0
    %549 = vmatprep.subr.mxu0 0.0
    %550 = vmatpush1.msra.mxu0 0.0
    %551 = vmatprep.subr.mxu0 0.0
    %552 = vmatpush1.msra.mxu0 0.0
    %553 = vmatprep.subr.mxu0 0.0
    %554 = vmatpush1.msra.mxu0 0.0
    %555 = vmatprep.subr.mxu0 0.0
    %556 = vmatpush1.msra.mxu0 0.0
    %557 = vmatprep.subr.mxu0 0.0
    %558 = vmatpush1.msra.mxu0 0.0
    %559 = vmatprep.subr.mxu0 0.0
    %560 = vmatpush1.msra.mxu0 0.0
    %561 = vmatprep.subr.mxu0 0.0
    %562 = vmatpush1.msra.mxu0 0.0
    %563 = vmatprep.subr.mxu0 0.0
    %564 = vmatpush1.msra.mxu0 0.0
    %565 = vmatprep.subr.mxu0 0.0
    %566 = vmatpush1.msra.mxu0 0.0
    %567 = vmatprep.subr.mxu0 0.0
    %568 = vmatpush1.msra.mxu0 0.0
    %569 = vmatprep.subr.mxu0 0.0
    %570 = vmatpush1.msra.mxu0 0.0
    %571 = vmatprep.subr.mxu0 0.0
    %572 = vmatpush1.msra.mxu0 0.0
    %573 = vmatprep.subr.mxu0 0.0
    %574 = vmatpush1.msra.mxu0 0.0
    %575 = vmatprep.subr.mxu0 0.0
    %576 = vmatpush1.msra.mxu0 0.0
    %577 = vmatprep.subr.mxu0 0.0
    %578 = vmatpush1.msra.mxu0 0.0
    %579 = vmatprep.subr.mxu0 0.0
    %580 = vmatpush1.msra.mxu0 0.0
    %581 = vmatprep.subr.mxu0 0.0
    %582 = vmatpush1.msra.mxu0 0.0
    %583 = vmatprep.subr.mxu0 0.0
    %584 = vmatpush1.msra.mxu0 0.0
    %585 = vmatprep.subr.mxu0 0.0
    %586 = vmatpush1.msra.mxu0 0.0
    %587 = vmatprep.subr.mxu0 0.0
    %588 = vmatpush1.msra.mxu0 0.0
    %589 = vmatprep.subr.mxu0 0.0
    %590 = vmatpush1.msra.mxu0 0.0
    %591 = vmatprep.subr.mxu0 0.0
    %592 = vmatpush1.msra.mxu0 0.0
    %593 = vmatprep.subr.mxu0 0.0
    %594 = vmatpush1.msra.mxu0 0.0
    %595 = vmatprep.subr.mxu0 0.0
    %596 = vmatpush1.msra.mxu0 0.0
    %597 = vmatprep.subr.mxu0 0.0
    %598 = vmatpush1.msra.mxu0 0.0
    %599 = vmatprep.subr.mxu0 0.0
    %600 = vmatpush1.msra.mxu0 0.0
    %601 = vmatprep.subr.mxu0 0.0
    %602 = vmatpush1.msra.mxu0 0.0
    %603 = vmatprep.mubr.f32.mxu0 0.0
    %v604 = vand.u32 %v42, 4294901760
    %605 = vmatmul.mubr.f32.gmra.mrb[0].mxu0 %v604
    %v606 = vpop.f32.mrb[0].mxu0
    %v607 = vadd.f32 %v517, %v606
    %v608 = vpop.f32.mrb[0].mxu0
    %609 = vmatprep.mubr.f32.mxu0 0.0
    %v610 = vand.u32 %v45, 4294901760
    %611 = vmatmul.mubr.f32.gmra.mrb[0].mxu0 %v610
    %v612 = vpop.f32.mrb[0].mxu0
    %v613 = vadd.f32 %v523, %v612
    %v614 = vpop.f32.mrb[0].mxu0
    %615 = vmatprep.mubr.f32.mxu0 0.0
    %v616 = vand.u32 %v48, 4294901760
    %617 = vmatmul.mubr.f32.gmra.mrb[0].mxu0 %v616
    %v618 = vpop.f32.mrb[0].mxu0
    %v619 = vadd.f32 %v529, %v618
    %v620 = vpop.f32.mrb[0].mxu0
    %621 = vmatprep.mubr.f32.mxu0 0.0
    %v622 = vand.u32 %v51, 4294901760
    %623 = vmatmul.mubr.f32.gmra.mrb[0].mxu0 %v622
    %v624 = vpop.f32.mrb[0].mxu0
    %v625 = vadd.f32 %v535, %v624
    %v626 = vpop.f32.mrb[0].mxu0
    %627 = vdwg.mxu0
    %628 = vmatprep.subr.mxu0 0.0
    %v629 = vand.u32 %v607, 4294901760
    %630 = vmatpush1.xpose.msra.mxu0 %v629
    %631 = vmatprep.subr.mxu0 0.0
    %v632 = vand.u32 %v613, 4294901760
    %633 = vmatpush1.xpose.msra.mxu0 %v632
    %634 = vmatprep.subr.mxu0 0.0
    %v635 = vand.u32 %v619, 4294901760
    %636 = vmatpush1.xpose.msra.mxu0 %v635
    %637 = vmatprep.subr.mxu0 0.0
    %v638 = vand.u32 %v625, 4294901760
    %639 = vmatpush1.xpose.msra.mxu0 %v638
    %640 = vmatprep.subr.mxu0 0.0
    %641 = vmatpush1.xpose.msra.mxu0 0.0
    %642 = vmatprep.subr.mxu0 0.0
    %643 = vmatpush1.xpose.msra.mxu0 0.0
    %644 = vmatprep.subr.mxu0 0.0
    %645 = vmatpush1.xpose.msra.mxu0 0.0
    %646 = vmatprep.subr.mxu0 0.0
    %647 = vmatpush1.xpose.msra.mxu0 0.0
    %648 = vmatprep.subr.mxu0 0.0
    %649 = vmatpush1.xpose.msra.mxu0 0.0
    %650 = vmatprep.subr.mxu0 0.0
    %651 = vmatpush1.xpose.msra.mxu0 0.0
    %652 = vmatprep.subr.mxu0 0.0
    %653 = vmatpush1.xpose.msra.mxu0 0.0
    %654 = vmatprep.subr.mxu0 0.0
    %655 = vmatpush1.xpose.msra.mxu0 0.0
    %656 = vmatprep.subr.mxu0 0.0
    %657 = vmatpush1.xpose.msra.mxu0 0.0
    %658 = vmatprep.subr.mxu0 0.0
    %659 = vmatpush1.xpose.msra.mxu0 0.0
    %660 = vmatprep.subr.mxu0 0.0
    %661 = vmatpush1.xpose.msra.mxu0 0.0
    %662 = vmatprep.subr.mxu0 0.0
    %663 = vmatpush1.xpose.msra.mxu0 0.0
    %664 = vmatprep.subr.mxu0 0.0
    %665 = vmatpush1.xpose.msra.mxu0 0.0
    %666 = vmatprep.subr.mxu0 0.0
    %667 = vmatpush1.xpose.msra.mxu0 0.0
    %668 = vmatprep.subr.mxu0 0.0
    %669 = vmatpush1.xpose.msra.mxu0 0.0
    %670 = vmatprep.subr.mxu0 0.0
    %671 = vmatpush1.xpose.msra.mxu0 0.0
    %672 = vmatprep.subr.mxu0 0.0
    %673 = vmatpush1.xpose.msra.mxu0 0.0
    %674 = vmatprep.subr.mxu0 0.0
    %675 = vmatpush1.xpose.msra.mxu0 0.0
    %676 = vmatprep.subr.mxu0 0.0
    %677 = vmatpush1.xpose.msra.mxu0 0.0
    %678 = vmatprep.subr.mxu0 0.0
    %679 = vmatpush1.xpose.msra.mxu0 0.0
    %680 = vmatprep.subr.mxu0 0.0
    %681 = vmatpush1.xpose.msra.mxu0 0.0
    %682 = vmatprep.subr.mxu0 0.0
    %683 = vmatpush1.xpose.msra.mxu0 0.0
    %684 = vmatprep.subr.mxu0 0.0
    %685 = vmatpush1.xpose.msra.mxu0 0.0
    %686 = vmatprep.subr.mxu0 0.0
    %687 = vmatpush1.xpose.msra.mxu0 0.0
    %688 = vmatprep.subr.mxu0 0.0
    %689 = vmatpush1.xpose.msra.mxu0 0.0
    %690 = vmatprep.subr.mxu0 0.0
    %691 = vmatpush1.xpose.msra.mxu0 0.0
    %692 = vmatprep.subr.mxu0 0.0
    %693 = vmatpush1.xpose.msra.mxu0 0.0
    %694 = vmatprep.subr.mxu0 0.0
    %695 = vmatpush1.xpose.msra.mxu0 0.0
    %696 = vmatprep.mubr.f32.mxu0 0.0
    %v697 = vand.u32 %v607, 4294901760
    %v698 = vsub.f32 %v607, %v697
    %v699 = vand.u32 %v698, 4294901760
    %v700 = vsub.f32 %v698, %v699
    %v701 = vand.u32 %v700, 4294901760
    %702 = vmatmul.mubr.f32.gmra.mrb[0].mxu0 %v701
    %v703 = vpop.f32.mrb[0].mxu0
    %v704 = vadd.f32 0.0, %v703
    %v705 = vpop.f32.mrb[0].mxu0
    %706 = vmatprep.mubr.f32.mxu0 0.0
    %v707 = vand.u32 %v613, 4294901760
    %v708 = vsub.f32 %v613, %v707
    %v709 = vand.u32 %v708, 4294901760
    %v710 = vsub.f32 %v708, %v709
    %v711 = vand.u32 %v710, 4294901760
    %712 = vmatmul.mubr.f32.gmra.mrb[0].mxu0 %v711
    %v713 = vpop.f32.mrb[0].mxu0
    %v714 = vadd.f32 0.0, %v713
    %v715 = vpop.f32.mrb[0].mxu0
    %716 = vmatprep.mubr.f32.mxu0 0.0
    %v717 = vand.u32 %v619, 4294901760
    %v718 = vsub.f32 %v619, %v717
    %v719 = vand.u32 %v718, 4294901760
    %v720 = vsub.f32 %v718, %v719
    %v721 = vand.u32 %v720, 4294901760
    %722 = vmatmul.mubr.f32.gmra.mrb[0].mxu0 %v721
    %v723 = vpop.f32.mrb[0].mxu0
    %v724 = vadd.f32 0.0, %v723
    %v725 = vpop.f32.mrb[0].mxu0
    %726 = vmatprep.mubr.f32.mxu0 0.0
    %v727 = vand.u32 %v625, 4294901760
    %v728 = vsub.f32 %v625, %v727
    %v729 = vand.u32 %v728, 4294901760
    %v730 = vsub.f32 %v728, %v729
    %v731 = vand.u32 %v730, 4294901760
    %732 = vmatmul.mubr.f32.gmra.mrb[0].mxu0 %v731
    %v733 = vpop.f32.mrb[0].mxu0
    %v734 = vadd.f32 0.0, %v733
    %v735 = vpop.f32.mrb[0].mxu0
    %736 = vdwg.mxu0
    %737 = vmatprep.subr.mxu0 0.0
    %v738 = vand.u32 %v607, 4294901760
    %v739 = vsub.f32 %v607, %v738
    %v740 = vand.u32 %v739, 4294901760
    %v741 = vsub.f32 %v739, %v740
    %v742 = vand.u32 %v741, 4294901760
    %743 = vmatpush1.xpose.msra.mxu0 %v742
    %744 = vmatprep.subr.mxu0 0.0
    %v745 = vand.u32 %v613, 4294901760
    %v746 = vsub.f32 %v613, %v745
    %v747 = vand.u32 %v746, 4294901760
    %v748 = vsub.f32 %v746, %v747
    %v749 = vand.u32 %v748, 4294901760
    %750 = vmatpush1.xpose.msra.mxu0 %v749
    %751 = vmatprep.subr.mxu0 0.0
    %v752 = vand.u32 %v619, 4294901760
    %v753 = vsub.f32 %v619, %v752
    %v754 = vand.u32 %v753, 4294901760
    %v755 = vsub.f32 %v753, %v754
    %v756 = vand.u32 %v755, 4294901760
    %757 = vmatpush1.xpose.msra.mxu0 %v756
    %758 = vmatprep.subr.mxu0 0.0
    %v759 = vand.u32 %v625, 4294901760
    %v760 = vsub.f32 %v625, %v759
    %v761 = vand.u32 %v760, 4294901760
    %v762 = vsub.f32 %v760, %v761
    %v763 = vand.u32 %v762, 4294901760
    %764 = vmatpush1.xpose.msra.mxu0 %v763
    %765 = vmatprep.subr.mxu0 0.0
    %766 = vmatpush1.xpose.msra.mxu0 0.0
    %767 = vmatprep.subr.mxu0 0.0
    %768 = vmatpush1.xpose.msra.mxu0 0.0
    %769 = vmatprep.subr.mxu0 0.0
    %770 = vmatpush1.xpose.msra.mxu0 0.0
    %771 = vmatprep.subr.mxu0 0.0
    %772 = vmatpush1.xpose.msra.mxu0 0.0
    %773 = vmatprep.subr.mxu0 0.0
    %774 = vmatpush1.xpose.msra.mxu0 0.0
    %775 = vmatprep.subr.mxu0 0.0
    %776 = vmatpush1.xpose.msra.mxu0 0.0
    %777 = vmatprep.subr.mxu0 0.0
    %778 = vmatpush1.xpose.msra.mxu0 0.0
    %779 = vmatprep.subr.mxu0 0.0
    %780 = vmatpush1.xpose.msra.mxu0 0.0
    %781 = vmatprep.subr.mxu0 0.0
    %782 = vmatpush1.xpose.msra.mxu0 0.0
    %783 = vmatprep.subr.mxu0 0.0
    %784 = vmatpush1.xpose.msra.mxu0 0.0
    %785 = vmatprep.subr.mxu0 0.0
    %786 = vmatpush1.xpose.msra.mxu0 0.0
    %787 = vmatprep.subr.mxu0 0.0
    %788 = vmatpush1.xpose.msra.mxu0 0.0
    %789 = vmatprep.subr.mxu0 0.0
    %790 = vmatpush1.xpose.msra.mxu0 0.0
    %791 = vmatprep.subr.mxu0 0.0
    %792 = vmatpush1.xpose.msra.mxu0 0.0
    %793 = vmatprep.subr.mxu0 0.0
    %794 = vmatpush1.xpose.msra.mxu0 0.0
    %795 = vmatprep.subr.mxu0 0.0
    %796 = vmatpush1.xpose.msra.mxu0 0.0
    %797 = vmatprep.subr.mxu0 0.0
    %798 = vmatpush1.xpose.msra.mxu0 0.0
    %799 = vmatprep.subr.mxu0 0.0
    %800 = vmatpush1.xpose.msra.mxu0 0.0
    %801 = vmatprep.subr.mxu0 0.0
    %802 = vmatpush1.xpose.msra.mxu0 0.0
    %803 = vmatprep.subr.mxu0 0.0
    %804 = vmatpush1.xpose.msra.mxu0 0.0
    %805 = vmatprep.subr.mxu0 0.0
    %806 = vmatpush1.xpose.msra.mxu0 0.0
    %807 = vmatprep.subr.mxu0 0.0
    %808 = vmatpush1.xpose.msra.mxu0 0.0
    %809 = vmatprep.subr.mxu0 0.0
    %810 = vmatpush1.xpose.msra.mxu0 0.0
    %811 = vmatprep.subr.mxu0 0.0
    %812 = vmatpush1.xpose.msra.mxu0 0.0
    %813 = vmatprep.subr.mxu0 0.0
    %814 = vmatpush1.xpose.msra.mxu0 0.0
    %815 = vmatprep.subr.mxu0 0.0
    %816 = vmatpush1.xpose.msra.mxu0 0.0
    %817 = vmatprep.subr.mxu0 0.0
    %818 = vmatpush1.xpose.msra.mxu0 0.0
    %819 = vmatprep.subr.mxu0 0.0
    %820 = vmatpush1.xpose.msra.mxu0 0.0
    %821 = vmatprep.mubr.f32.mxu0 0.0
    %v822 = vand.u32 %v607, 4294901760
    %823 = vmatmul.mubr.f32.gmra.mrb[0].mxu0 %v822
    %v824 = vpop.f32.mrb[0].mxu0
    %v825 = vadd.f32 %v704, %v824
    %v826 = vpop.f32.mrb[0].mxu0
    %827 = vmatprep.mubr.f32.mxu0 0.0
    %v828 = vand.u32 %v613, 4294901760
    %829 = vmatmul.mubr.f32.gmra.mrb[0].mxu0 %v828
    %v830 = vpop.f32.mrb[0].mxu0
    %v831 = vadd.f32 %v714, %v830
    %v832 = vpop.f32.mrb[0].mxu0
    %833 = vmatprep.mubr.f32.mxu0 0.0
    %v834 = vand.u32 %v619, 4294901760
    %835 = vmatmul.mubr.f32.gmra.mrb[0].mxu0 %v834
    %v836 = vpop.f32.mrb[0].mxu0
    %v837 = vadd.f32 %v724, %v836
    %v838 = vpop.f32.mrb[0].mxu0
    %839 = vmatprep.mubr.f32.mxu0 0.0
    %v840 = vand.u32 %v625, 4294901760
    %841 = vmatmul.mubr.f32.gmra.mrb[0].mxu0 %v840
    %v842 = vpop.f32.mrb[0].mxu0
    %v843 = vadd.f32 %v734, %v842
    %v844 = vpop.f32.mrb[0].mxu0
    %845 = vdwg.mxu0
    %846 = vmatprep.subr.mxu0 0.0
    %v847 = vand.u32 %v607, 4294901760
    %v848 = vsub.f32 %v607, %v847
    %849 = vmatpush1.xpose.msra.mxu0 %v848
    %850 = vmatprep.subr.mxu0 0.0
    %v851 = vand.u32 %v613, 4294901760
    %v852 = vsub.f32 %v613, %v851
    %853 = vmatpush1.xpose.msra.mxu0 %v852
    %854 = vmatprep.subr.mxu0 0.0
    %v855 = vand.u32 %v619, 4294901760
    %v856 = vsub.f32 %v619, %v855
    %857 = vmatpush1.xpose.msra.mxu0 %v856
    %858 = vmatprep.subr.mxu0 0.0
    %v859 = vand.u32 %v625, 4294901760
    %v860 = vsub.f32 %v625, %v859
    %861 = vmatpush1.xpose.msra.mxu0 %v860
    %862 = vmatprep.subr.mxu0 0.0
    %863 = vmatpush1.xpose.msra.mxu0 0.0
    %864 = vmatprep.subr.mxu0 0.0
    %865 = vmatpush1.xpose.msra.mxu0 0.0
    %866 = vmatprep.subr.mxu0 0.0
    %867 = vmatpush1.xpose.msra.mxu0 0.0
    %868 = vmatprep.subr.mxu0 0.0
    %869 = vmatpush1.xpose.msra.mxu0 0.0
    %870 = vmatprep.subr.mxu0 0.0
    %871 = vmatpush1.xpose.msra.mxu0 0.0
    %872 = vmatprep.subr.mxu0 0.0
    %873 = vmatpush1.xpose.msra.mxu0 0.0
    %874 = vmatprep.subr.mxu0 0.0
    %875 = vmatpush1.xpose.msra.mxu0 0.0
    %876 = vmatprep.subr.mxu0 0.0
    %877 = vmatpush1.xpose.msra.mxu0 0.0
    %878 = vmatprep.subr.mxu0 0.0
    %879 = vmatpush1.xpose.msra.mxu0 0.0
    %880 = vmatprep.subr.mxu0 0.0
    %881 = vmatpush1.xpose.msra.mxu0 0.0
    %882 = vmatprep.subr.mxu0 0.0
    %883 = vmatpush1.xpose.msra.mxu0 0.0
    %884 = vmatprep.subr.mxu0 0.0
    %885 = vmatpush1.xpose.msra.mxu0 0.0
    %886 = vmatprep.subr.mxu0 0.0
    %887 = vmatpush1.xpose.msra.mxu0 0.0
    %888 = vmatprep.subr.mxu0 0.0
    %889 = vmatpush1.xpose.msra.mxu0 0.0
    %890 = vmatprep.subr.mxu0 0.0
    %891 = vmatpush1.xpose.msra.mxu0 0.0
    %892 = vmatprep.subr.mxu0 0.0
    %893 = vmatpush1.xpose.msra.mxu0 0.0
    %894 = vmatprep.subr.mxu0 0.0
    %895 = vmatpush1.xpose.msra.mxu0 0.0
    %896 = vmatprep.subr.mxu0 0.0
    %897 = vmatpush1.xpose.msra.mxu0 0.0
    %898 = vmatprep.subr.mxu0 0.0
    %899 = vmatpush1.xpose.msra.mxu0 0.0
    %900 = vmatprep.subr.mxu0 0.0
    %901 = vmatpush1.xpose.msra.mxu0 0.0
    %902 = vmatprep.subr.mxu0 0.0
    %903 = vmatpush1.xpose.msra.mxu0 0.0
    %904 = vmatprep.subr.mxu0 0.0
    %905 = vmatpush1.xpose.msra.mxu0 0.0
    %906 = vmatprep.subr.mxu0 0.0
    %907 = vmatpush1.xpose.msra.mxu0 0.0
    %908 = vmatprep.subr.mxu0 0.0
    %909 = vmatpush1.xpose.msra.mxu0 0.0
    %910 = vmatprep.subr.mxu0 0.0
    %911 = vmatpush1.xpose.msra.mxu0 0.0
    %912 = vmatprep.subr.mxu0 0.0
    %913 = vmatpush1.xpose.msra.mxu0 0.0
    %914 = vmatprep.subr.mxu0 0.0
    %915 = vmatpush1.xpose.msra.mxu0 0.0
    %916 = vmatprep.subr.mxu0 0.0
    %917 = vmatpush1.xpose.msra.mxu0 0.0
    %918 = vmatprep.mubr.f32.mxu0 0.0
    %v919 = vand.u32 %v607, 4294901760
    %v920 = vsub.f32 %v607, %v919
    %921 = vmatmul.mubr.f32.gmra.mrb[0].mxu0 %v920
    %v922 = vpop.f32.mrb[0].mxu0
    %v923 = vadd.f32 %v825, %v922
    %v924 = vpop.f32.mrb[0].mxu0
    %925 = vmatprep.mubr.f32.mxu0 0.0
    %v926 = vand.u32 %v613, 4294901760
    %v927 = vsub.f32 %v613, %v926
    %928 = vmatmul.mubr.f32.gmra.mrb[0].mxu0 %v927
    %v929 = vpop.f32.mrb[0].mxu0
    %v930 = vadd.f32 %v831, %v929
    %v931 = vpop.f32.mrb[0].mxu0
    %932 = vmatprep.mubr.f32.mxu0 0.0
    %v933 = vand.u32 %v619, 4294901760
    %v934 = vsub.f32 %v619, %v933
    %935 = vmatmul.mubr.f32.gmra.mrb[0].mxu0 %v934
    %v936 = vpop.f32.mrb[0].mxu0
    %v937 = vadd.f32 %v837, %v936
    %v938 = vpop.f32.mrb[0].mxu0
    %939 = vmatprep.mubr.f32.mxu0 0.0
    %v940 = vand.u32 %v625, 4294901760
    %v941 = vsub.f32 %v625, %v940
    %942 = vmatmul.mubr.f32.gmra.mrb[0].mxu0 %v941
    %v943 = vpop.f32.mrb[0].mxu0
    %v944 = vadd.f32 %v843, %v943
    %v945 = vpop.f32.mrb[0].mxu0
    %946 = vdwg.mxu0
    %947 = vmatprep.subr.mxu0 0.0
    %v948 = vand.u32 %v607, 4294901760
    %949 = vmatpush1.xpose.msra.mxu0 %v948
    %950 = vmatprep.subr.mxu0 0.0
    %v951 = vand.u32 %v613, 4294901760
    %952 = vmatpush1.xpose.msra.mxu0 %v951
    %953 = vmatprep.subr.mxu0 0.0
    %v954 = vand.u32 %v619, 4294901760
    %955 = vmatpush1.xpose.msra.mxu0 %v954
    %956 = vmatprep.subr.mxu0 0.0
    %v957 = vand.u32 %v625, 4294901760
    %958 = vmatpush1.xpose.msra.mxu0 %v957
    %959 = vmatprep.subr.mxu0 0.0
    %960 = vmatpush1.xpose.msra.mxu0 0.0
    %961 = vmatprep.subr.mxu0 0.0
    %962 = vmatpush1.xpose.msra.mxu0 0.0
    %963 = vmatprep.subr.mxu0 0.0
    %964 = vmatpush1.xpose.msra.mxu0 0.0
    %965 = vmatprep.subr.mxu0 0.0
    %966 = vmatpush1.xpose.msra.mxu0 0.0
    %967 = vmatprep.subr.mxu0 0.0
    %968 = vmatpush1.xpose.msra.mxu0 0.0
    %969 = vmatprep.subr.mxu0 0.0
    %970 = vmatpush1.xpose.msra.mxu0 0.0
    %971 = vmatprep.subr.mxu0 0.0
    %972 = vmatpush1.xpose.msra.mxu0 0.0
    %973 = vmatprep.subr.mxu0 0.0
    %974 = vmatpush1.xpose.msra.mxu0 0.0
    %975 = vmatprep.subr.mxu0 0.0
    %976 = vmatpush1.xpose.msra.mxu0 0.0
    %977 = vmatprep.subr.mxu0 0.0
    %978 = vmatpush1.xpose.msra.mxu0 0.0
    %979 = vmatprep.subr.mxu0 0.0
    %980 = vmatpush1.xpose.msra.mxu0 0.0
    %981 = vmatprep.subr.mxu0 0.0
    %982 = vmatpush1.xpose.msra.mxu0 0.0
    %983 = vmatprep.subr.mxu0 0.0
    %984 = vmatpush1.xpose.msra.mxu0 0.0
    %985 = vmatprep.subr.mxu0 0.0
    %986 = vmatpush1.xpose.msra.mxu0 0.0
    %987 = vmatprep.subr.mxu0 0.0
    %988 = vmatpush1.xpose.msra.mxu0 0.0
    %989 = vmatprep.subr.mxu0 0.0
    %990 = vmatpush1.xpose.msra.mxu0 0.0
    %991 = vmatprep.subr.mxu0 0.0
    %992 = vmatpush1.xpose.msra.mxu0 0.0
    %993 = vmatprep.subr.mxu0 0.0
    %994 = vmatpush1.xpose.msra.mxu0 0.0
    %995 = vmatprep.subr.mxu0 0.0
    %996 = vmatpush1.xpose.msra.mxu0 0.0
    %997 = vmatprep.subr.mxu0 0.0
    %998 = vmatpush1.xpose.msra.mxu0 0.0
    %999 = vmatprep.subr.mxu0 0.0
    %1000 = vmatpush1.xpose.msra.mxu0 0.0
    %1001 = vmatprep.subr.mxu0 0.0
    %1002 = vmatpush1.xpose.msra.mxu0 0.0
    %1003 = vmatprep.subr.mxu0 0.0
    %1004 = vmatpush1.xpose.msra.mxu0 0.0
    %1005 = vmatprep.subr.mxu0 0.0
    %1006 = vmatpush1.xpose.msra.mxu0 0.0
    %1007 = vmatprep.subr.mxu0 0.0
    %1008 = vmatpush1.xpose.msra.mxu0 0.0
    %1009 = vmatprep.subr.mxu0 0.0
    %1010 = vmatpush1.xpose.msra.mxu0 0.0
    %1011 = vmatprep.subr.mxu0 0.0
    %1012 = vmatpush1.xpose.msra.mxu0 0.0
    %1013 = vmatprep.subr.mxu0 0.0
    %1014 = vmatpush1.xpose.msra.mxu0 0.0
    %1015 = vmatprep.mubr.f32.mxu0 0.0
    %v1016 = vand.u32 %v607, 4294901760
    %v1017 = vsub.f32 %v607, %v1016
    %v1018 = vand.u32 %v1017, 4294901760
    %1019 = vmatmul.mubr.f32.gmra.mrb[0].mxu0 %v1018
    %v1020 = vpop.f32.mrb[0].mxu0
    %v1021 = vadd.f32 %v923, %v1020
    %v1022 = vpop.f32.mrb[0].mxu0
    %1023 = vmatprep.mubr.f32.mxu0 0.0
    %v1024 = vand.u32 %v613, 4294901760
    %v1025 = vsub.f32 %v613, %v1024
    %v1026 = vand.u32 %v1025, 4294901760
    %1027 = vmatmul.mubr.f32.gmra.mrb[0].mxu0 %v1026
    %v1028 = vpop.f32.mrb[0].mxu0
    %v1029 = vadd.f32 %v930, %v1028
    %v1030 = vpop.f32.mrb[0].mxu0
    %1031 = vmatprep.mubr.f32.mxu0 0.0
    %v1032 = vand.u32 %v619, 4294901760
    %v1033 = vsub.f32 %v619, %v1032
    %v1034 = vand.u32 %v1033, 4294901760
    %1035 = vmatmul.mubr.f32.gmra.mrb[0].mxu0 %v1034
    %v1036 = vpop.f32.mrb[0].mxu0
    %v1037 = vadd.f32 %v937, %v1036
    %v1038 = vpop.f32.mrb[0].mxu0
    %1039 = vmatprep.mubr.f32.mxu0 0.0
    %v1040 = vand.u32 %v625, 4294901760
    %v1041 = vsub.f32 %v625, %v1040
    %v1042 = vand.u32 %v1041, 4294901760
    %1043 = vmatmul.mubr.f32.gmra.mrb[0].mxu0 %v1042
    %v1044 = vpop.f32.mrb[0].mxu0
    %v1045 = vadd.f32 %v944, %v1044
    %v1046 = vpop.f32.mrb[0].mxu0
    %1047 = vdwg.mxu0
    %1048 = vmatprep.subr.mxu0 0.0
    %v1049 = vand.u32 %v607, 4294901760
    %v1050 = vsub.f32 %v607, %v1049
    %v1051 = vand.u32 %v1050, 4294901760
    %1052 = vmatpush1.xpose.msra.mxu0 %v1051
    %1053 = vmatprep.subr.mxu0 0.0
    %v1054 = vand.u32 %v613, 4294901760
    %v1055 = vsub.f32 %v613, %v1054
    %v1056 = vand.u32 %v1055, 4294901760
    %1057 = vmatpush1.xpose.msra.mxu0 %v1056
    %1058 = vmatprep.subr.mxu0 0.0
    %v1059 = vand.u32 %v619, 4294901760
    %v1060 = vsub.f32 %v619, %v1059
    %v1061 = vand.u32 %v1060, 4294901760
    %1062 = vmatpush1.xpose.msra.mxu0 %v1061
    %1063 = vmatprep.subr.mxu0 0.0
    %v1064 = vand.u32 %v625, 4294901760
    %v1065 = vsub.f32 %v625, %v1064
    %v1066 = vand.u32 %v1065, 4294901760
    %1067 = vmatpush1.xpose.msra.mxu0 %v1066
    %1068 = vmatprep.subr.mxu0 0.0
    %1069 = vmatpush1.xpose.msra.mxu0 0.0
    %1070 = vmatprep.subr.mxu0 0.0
    %1071 = vmatpush1.xpose.msra.mxu0 0.0
    %1072 = vmatprep.subr.mxu0 0.0
    %1073 = vmatpush1.xpose.msra.mxu0 0.0
    %1074 = vmatprep.subr.mxu0 0.0
    %1075 = vmatpush1.xpose.msra.mxu0 0.0
    %1076 = vmatprep.subr.mxu0 0.0
    %1077 = vmatpush1.xpose.msra.mxu0 0.0
    %1078 = vmatprep.subr.mxu0 0.0
    %1079 = vmatpush1.xpose.msra.mxu0 0.0
    %1080 = vmatprep.subr.mxu0 0.0
    %1081 = vmatpush1.xpose.msra.mxu0 0.0
    %1082 = vmatprep.subr.mxu0 0.0
    %1083 = vmatpush1.xpose.msra.mxu0 0.0
    %1084 = vmatprep.subr.mxu0 0.0
    %1085 = vmatpush1.xpose.msra.mxu0 0.0
    %1086 = vmatprep.subr.mxu0 0.0
    %1087 = vmatpush1.xpose.msra.mxu0 0.0
    %1088 = vmatprep.subr.mxu0 0.0
    %1089 = vmatpush1.xpose.msra.mxu0 0.0
    %1090 = vmatprep.subr.mxu0 0.0
    %1091 = vmatpush1.xpose.msra.mxu0 0.0
    %1092 = vmatprep.subr.mxu0 0.0
    %1093 = vmatpush1.xpose.msra.mxu0 0.0
    %1094 = vmatprep.subr.mxu0 0.0
    %1095 = vmatpush1.xpose.msra.mxu0 0.0
    %1096 = vmatprep.subr.mxu0 0.0
    %1097 = vmatpush1.xpose.msra.mxu0 0.0
    %1098 = vmatprep.subr.mxu0 0.0
    %1099 = vmatpush1.xpose.msra.mxu0 0.0
    %1100 = vmatprep.subr.mxu0 0.0
    %1101 = vmatpush1.xpose.msra.mxu0 0.0
    %1102 = vmatprep.subr.mxu0 0.0
    %1103 = vmatpush1.xpose.msra.mxu0 0.0
    %1104 = vmatprep.subr.mxu0 0.0
    %1105 = vmatpush1.xpose.msra.mxu0 0.0
    %1106 = vmatprep.subr.mxu0 0.0
    %1107 = vmatpush1.xpose.msra.mxu0 0.0
    %1108 = vmatprep.subr.mxu0 0.0
    %1109 = vmatpush1.xpose.msra.mxu0 0.0
    %1110 = vmatprep.subr.mxu0 0.0
    %1111 = vmatpush1.xpose.msra.mxu0 0.0
    %1112 = vmatprep.subr.mxu0 0.0
    %1113 = vmatpush1.xpose.msra.mxu0 0.0
    %1114 = vmatprep.subr.mxu0 0.0
    %1115 = vmatpush1.xpose.msra.mxu0 0.0
    %1116 = vmatprep.subr.mxu0 0.0
    %1117 = vmatpush1.xpose.msra.mxu0 0.0
    %1118 = vmatprep.subr.mxu0 0.0
    %1119 = vmatpush1.xpose.msra.mxu0 0.0
    %1120 = vmatprep.subr.mxu0 0.0
    %1121 = vmatpush1.xpose.msra.mxu0 0.0
    %1122 = vmatprep.subr.mxu0 0.0
    %1123 = vmatpush1.xpose.msra.mxu0 0.0
    %1124 = vmatprep.mubr.f32.mxu0 0.0
    %v1125 = vand.u32 %v607, 4294901760
    %1126 = vmatmul.mubr.f32.gmra.mrb[0].mxu0 %v1125
    %v1127 = vpop.f32.mrb[0].mxu0
    %v1128 = vadd.f32 %v1021, %v1127
    %v1129 = vpop.f32.mrb[0].mxu0
    %1130 = vmatprep.mubr.f32.mxu0 0.0
    %v1131 = vand.u32 %v613, 4294901760
    %1132 = vmatmul.mubr.f32.gmra.mrb[0].mxu0 %v1131
    %v1133 = vpop.f32.mrb[0].mxu0
    %v1134 = vadd.f32 %v1029, %v1133
    %v1135 = vpop.f32.mrb[0].mxu0
    %1136 = vmatprep.mubr.f32.mxu0 0.0
    %v1137 = vand.u32 %v619, 4294901760
    %1138 = vmatmul.mubr.f32.gmra.mrb[0].mxu0 %v1137
    %v1139 = vpop.f32.mrb[0].mxu0
    %v1140 = vadd.f32 %v1037, %v1139
    %v1141 = vpop.f32.mrb[0].mxu0
    %1142 = vmatprep.mubr.f32.mxu0 0.0
    %v1143 = vand.u32 %v625, 4294901760
    %1144 = vmatmul.mubr.f32.gmra.mrb[0].mxu0 %v1143
    %v1145 = vpop.f32.mrb[0].mxu0
    %v1146 = vadd.f32 %v1045, %v1145
    %v1147 = vpop.f32.mrb[0].mxu0
    %1148 = vdwg.mxu0
    %1149 = vmatprep.subr.mxu0 0.0
    %v1150 = vand.u32 %v607, 4294901760
    %1151 = vmatpush1.xpose.msra.mxu0 %v1150
    %1152 = vmatprep.subr.mxu0 0.0
    %v1153 = vand.u32 %v613, 4294901760
    %1154 = vmatpush1.xpose.msra.mxu0 %v1153
    %1155 = vmatprep.subr.mxu0 0.0
    %v1156 = vand.u32 %v619, 4294901760
    %1157 = vmatpush1.xpose.msra.mxu0 %v1156
    %1158 = vmatprep.subr.mxu0 0.0
    %v1159 = vand.u32 %v625, 4294901760
    %1160 = vmatpush1.xpose.msra.mxu0 %v1159
    %1161 = vmatprep.subr.mxu0 0.0
    %1162 = vmatpush1.xpose.msra.mxu0 0.0
    %1163 = vmatprep.subr.mxu0 0.0
    %1164 = vmatpush1.xpose.msra.mxu0 0.0
    %1165 = vmatprep.subr.mxu0 0.0
    %1166 = vmatpush1.xpose.msra.mxu0 0.0
    %1167 = vmatprep.subr.mxu0 0.0
    %1168 = vmatpush1.xpose.msra.mxu0 0.0
    %1169 = vmatprep.subr.mxu0 0.0
    %1170 = vmatpush1.xpose.msra.mxu0 0.0
    %1171 = vmatprep.subr.mxu0 0.0
    %1172 = vmatpush1.xpose.msra.mxu0 0.0
    %1173 = vmatprep.subr.mxu0 0.0
    %1174 = vmatpush1.xpose.msra.mxu0 0.0
    %1175 = vmatprep.subr.mxu0 0.0
    %1176 = vmatpush1.xpose.msra.mxu0 0.0
    %1177 = vmatprep.subr.mxu0 0.0
    %1178 = vmatpush1.xpose.msra.mxu0 0.0
    %1179 = vmatprep.subr.mxu0 0.0
    %1180 = vmatpush1.xpose.msra.mxu0 0.0
    %1181 = vmatprep.subr.mxu0 0.0
    %1182 = vmatpush1.xpose.msra.mxu0 0.0
    %1183 = vmatprep.subr.mxu0 0.0
    %1184 = vmatpush1.xpose.msra.mxu0 0.0
    %1185 = vmatprep.subr.mxu0 0.0
    %1186 = vmatpush1.xpose.msra.mxu0 0.0
    %1187 = vmatprep.subr.mxu0 0.0
    %1188 = vmatpush1.xpose.msra.mxu0 0.0
    %1189 = vmatprep.subr.mxu0 0.0
    %1190 = vmatpush1.xpose.msra.mxu0 0.0
    %1191 = vmatprep.subr.mxu0 0.0
    %1192 = vmatpush1.xpose.msra.mxu0 0.0
    %1193 = vmatprep.subr.mxu0 0.0
    %1194 = vmatpush1.xpose.msra.mxu0 0.0
    %1195 = vmatprep.subr.mxu0 0.0
    %1196 = vmatpush1.xpose.msra.mxu0 0.0
    %1197 = vmatprep.subr.mxu0 0.0
    %1198 = vmatpush1.xpose.msra.mxu0 0.0
    %1199 = vmatprep.subr.mxu0 0.0
    %1200 = vmatpush1.xpose.msra.mxu0 0.0
    %1201 = vmatprep.subr.mxu0 0.0
    %1202 = vmatpush1.xpose.msra.mxu0 0.0
    %1203 = vmatprep.subr.mxu0 0.0
    %1204 = vmatpush1.xpose.msra.mxu0 0.0
    %1205 = vmatprep.subr.mxu0 0.0
    %1206 = vmatpush1.xpose.msra.mxu0 0.0
    %1207 = vmatprep.subr.mxu0 0.0
    %1208 = vmatpush1.xpose.msra.mxu0 0.0
    %1209 = vmatprep.subr.mxu0 0.0
    %1210 = vmatpush1.xpose.msra.mxu0 0.0
    %1211 = vmatprep.subr.mxu0 0.0
    %1212 = vmatpush1.xpose.msra.mxu0 0.0
    %1213 = vmatprep.subr.mxu0 0.0
    %1214 = vmatpush1.xpose.msra.mxu0 0.0
    %1215 = vmatprep.subr.mxu0 0.0
    %1216 = vmatpush1.xpose.msra.mxu0 0.0
    %1217 = vmatprep.mubr.f32.mxu0 0.0
    %v1218 = vand.u32 %v607, 4294901760
    %1219 = vmatmul.mubr.f32.gmra.mrb[0].mxu0 %v1218
    %v1220 = vpop.f32.mrb[0].mxu0
    %v1221 = vadd.f32 %v1128, %v1220
    %v1222 = vpop.f32.mrb[0].mxu0
    %1223 = vmatprep.mubr.f32.mxu0 0.0
    %v1224 = vand.u32 %v613, 4294901760
    %1225 = vmatmul.mubr.f32.gmra.mrb[0].mxu0 %v1224
    %v1226 = vpop.f32.mrb[0].mxu0
    %v1227 = vadd.f32 %v1134, %v1226
    %v1228 = vpop.f32.mrb[0].mxu0
    %1229 = vmatprep.mubr.f32.mxu0 0.0
    %v1230 = vand.u32 %v619, 4294901760
    %1231 = vmatmul.mubr.f32.gmra.mrb[0].mxu0 %v1230
    %v1232 = vpop.f32.mrb[0].mxu0
    %v1233 = vadd.f32 %v1140, %v1232
    %v1234 = vpop.f32.mrb[0].mxu0
    %1235 = vmatprep.mubr.f32.mxu0 0.0
    %v1236 = vand.u32 %v625, 4294901760
    %1237 = vmatmul.mubr.f32.gmra.mrb[0].mxu0 %v1236
    %v1238 = vpop.f32.mrb[0].mxu0
    %v1239 = vadd.f32 %v1146, %v1238
    %v1240 = vpop.f32.mrb[0].mxu0
    %1241 = vdwg.mxu0
    %v1242 = vld [vmem:[%s1] sm:$0xff]
    %v1243 = vld [vmem:[%s1 + $0x8] sm:$0xff]
    %v1244 = vld [vmem:[%s1 + $0x10] sm:$0xff]
    %v1245 = vld [vmem:[%s1 + $0x18] sm:$0xff]
    %v1246 = vmul.f32 %v1221, %v1242
    %v1247 = vmul.f32 %v1227, %v1243
    %v1248 = vmul.f32 %v1233, %v1244
    %v1249 = vmul.f32 %v1239, %v1245
    %vm1250 = vcmp.eq.f32.partialorder %v1246, 0.0
    %vm1251 = vcmp.eq.f32.partialorder %v1247, 0.0
    %vm1252 = vcmp.eq.f32.partialorder %v1248, 0.0
    %vm1253 = vcmp.eq.f32.partialorder %v1249, 0.0
    %v1254 = vsel %vm1250, -1e+16, %v1246
    %v1255 = vsel %vm1251, -1e+16, %v1247
    %v1256 = vsel %vm1252, -1e+16, %v1248
    %v1257 = vsel %vm1253, -1e+16, %v1249
    %v1258 = vld [vmem:[#allocation2] sm:$0xff]
    %v1259 = vld [vmem:[#allocation2 + $0x8] sm:$0xff]
    %v1260 = vld [vmem:[#allocation2 + $0x10] sm:$0xff]
    %v1261 = vld [vmem:[#allocation2 + $0x18] sm:$0xff]
    %v1262 = vadd.f32 %v1254, %v1258
    %v1263 = vadd.f32 %v1255, %v1259
    %v1264 = vadd.f32 %v1256, %v1260
    %v1265 = vadd.f32 %v1257, %v1261
    %vm1266 = vcmask 261120
    %v1267 = vsel %vm1266, %v1262, -inf
    %1268 = vmax.xlane.f32.xlu0 %v1267
    %v1269 = vpop.xlane.xlu0 %1268
    %v1270 = vsel %vm1266, %v1263, -inf
    %1271 = vmax.xlane.f32.xlu0 %v1270
    %v1272 = vpop.xlane.xlu0 %1271
    %v1273 = vsel %vm1266, %v1264, -inf
    %1274 = vmax.xlane.f32.xlu0 %v1273
    %v1275 = vpop.xlane.xlu0 %1274
    %v1276 = vsel %vm1266, %v1265, -inf
    %1277 = vmax.xlane.f32.xlu0 %v1276
    %v1278 = vpop.xlane.xlu0 %1277
    %v1279 = vsub.f32 %v1262, %v1269
    %v1280 = vsub.f32 %v1263, %v1272
    %v1281 = vsub.f32 %v1264, %v1275
    %v1282 = vsub.f32 %v1265, %v1278
    %v1283 = vmul.f32 %v1279, 1.442695
    %v1284 = vpow.pop %v1283
    %v1285 = vmul.f32 %v1280, 1.442695
    %v1286 = vpow.pop %v1285
    %v1287 = vmul.f32 %v1281, 1.442695
    %v1288 = vpow.pop %v1287
    %v1289 = vmul.f32 %v1282, 1.442695
    %v1290 = vpow.pop %v1289
    %v1291 = vsel %vm1266, %v1284, 0.0
    %1292 = vadd.xlane.f32.xlu0 %v1291
    %v1293 = vpop.xlane.xlu0 %1292
    %v1294 = vsel %vm1266, %v1286, 0.0
    %1295 = vadd.xlane.f32.xlu0 %v1294
    %v1296 = vpop.xlane.xlu0 %1295
    %v1297 = vsel %vm1266, %v1288, 0.0
    %1298 = vadd.xlane.f32.xlu0 %v1297
    %v1299 = vpop.xlane.xlu0 %1298
    %v1300 = vsel %vm1266, %v1290, 0.0
    %1301 = vadd.xlane.f32.xlu0 %v1300
    %v1302 = vpop.xlane.xlu0 %1301
    %v1303 = vrcp.pop %v1293
    %v1304 = vmul.f32 %v1284, %v1303
    %v1305 = vrcp.pop %v1296
    %v1306 = vmul.f32 %v1286, %v1305
    %v1307 = vrcp.pop %v1299
    %v1308 = vmul.f32 %v1288, %v1307
    %v1309 = vrcp.pop %v1302
    %v1310 = vmul.f32 %v1290, %v1309
    %v1311 = vld [vmem:[%s4] sm:$0x1]
    %v1313 = vlaneseq
    %v1314 = vshrl.u32 %v1313, 7
    %v1315 = vsub.s32 0, %v1314
    %v1316 = vrot.slane %v1311, %v1315
    %v1319 = vsel %vm1266, %v1304, 0
    %v1322 = vsel %vm1266, %v1306, 0
    %v1325 = vsel %vm1266, %v1308, 0
    %v1328 = vsel %vm1266, %v1310, 0
    %1330 = vmatprep.subr.mxu0 0.0
    %v1331 = vand.u32 %v607, 4294901760
    %1332 = vmatpush1.msra.mxu0 %v1331
    %1333 = vmatprep.subr.mxu0 0.0
    %v1334 = vand.u32 %v613, 4294901760
    %1335 = vmatpush1.msra.mxu0 %v1334
    %1336 = vmatprep.subr.mxu0 0.0
    %v1337 = vand.u32 %v619, 4294901760
    %1338 = vmatpush1.msra.mxu0 %v1337
    %1339 = vmatprep.subr.mxu0 0.0
    %v1340 = vand.u32 %v625, 4294901760
    %1341 = vmatpush1.msra.mxu0 %v1340
    %1342 = vmatprep.subr.mxu0 0.0
    %1343 = vmatpush1.msra.mxu0 0.0
    %1344 = vmatprep.subr.mxu0 0.0
    %1345 = vmatpush1.msra.mxu0 0.0
    %1346 = vmatprep.subr.mxu0 0.0
    %1347 = vmatpush1.msra.mxu0 0.0
    %1348 = vmatprep.subr.mxu0 0.0
    %1349 = vmatpush1.msra.mxu0 0.0
    %1350 = vmatprep.subr.mxu0 0.0
    %1351 = vmatpush1.msra.mxu0 0.0
    %1352 = vmatprep.subr.mxu0 0.0
    %1353 = vmatpush1.msra.mxu0 0.0
    %1354 = vmatprep.subr.mxu0 0.0
    %1355 = vmatpush1.msra.mxu0 0.0
    %1356 = vmatprep.subr.mxu0 0.0
    %1357 = vmatpush1.msra.mxu0 0.0
    %1358 = vmatprep.subr.mxu0 0.0
    %1359 = vmatpush1.msra.mxu0 0.0
    %1360 = vmatprep.subr.mxu0 0.0
    %1361 = vmatpush1.msra.mxu0 0.0
    %1362 = vmatprep.subr.mxu0 0.0
    %1363 = vmatpush1.msra.mxu0 0.0
    %1364 = vmatprep.subr.mxu0 0.0
    %1365 = vmatpush1.msra.mxu0 0.0
    %1366 = vmatprep.subr.mxu0 0.0
    %1367 = vmatpush1.msra.mxu0 0.0
    %1368 = vmatprep.subr.mxu0 0.0
    %1369 = vmatpush1.msra.mxu0 0.0
    %1370 = vmatprep.subr.mxu0 0.0
    %1371 = vmatpush1.msra.mxu0 0.0
    %1372 = vmatprep.subr.mxu0 0.0
    %1373 = vmatpush1.msra.mxu0 0.0
    %1374 = vmatprep.subr.mxu0 0.0
    %1375 = vmatpush1.msra.mxu0 0.0
    %1376 = vmatprep.subr.mxu0 0.0
    %1377 = vmatpush1.msra.mxu0 0.0
    %1378 = vmatprep.subr.mxu0 0.0
    %1379 = vmatpush1.msra.mxu0 0.0
    %1380 = vmatprep.subr.mxu0 0.0
    %1381 = vmatpush1.msra.mxu0 0.0
    %1382 = vmatprep.subr.mxu0 0.0
    %1383 = vmatpush1.msra.mxu0 0.0
    %1384 = vmatprep.subr.mxu0 0.0
    %1385 = vmatpush1.msra.mxu0 0.0
    %1386 = vmatprep.subr.mxu0 0.0
    %1387 = vmatpush1.msra.mxu0 0.0
    %1388 = vmatprep.subr.mxu0 0.0
    %1389 = vmatpush1.msra.mxu0 0.0
    %1390 = vmatprep.subr.mxu0 0.0
    %1391 = vmatpush1.msra.mxu0 0.0
    %1392 = vmatprep.subr.mxu0 0.0
    %1393 = vmatpush1.msra.mxu0 0.0
    %1394 = vmatprep.subr.mxu0 0.0
    %1395 = vmatpush1.msra.mxu0 0.0
    %1396 = vmatprep.subr.mxu0 0.0
    %1397 = vmatpush1.msra.mxu0 0.0
    %1398 = vmatprep.mubr.f32.mxu0 0.0
    %v1399 = vand.u32 %v1319, 4294901760
    %v1400 = vsub.f32 %v1319, %v1399
    %v1401 = vand.u32 %v1400, 4294901760
    %v1402 = vsub.f32 %v1400, %v1401
    %v1403 = vand.u32 %v1402, 4294901760
    %1404 = vmatmul.mubr.f32.gmra.mrb[0].mxu0 %v1403
    %v1405 = vpop.f32.mrb[0].mxu0
    %v1406 = vadd.f32 %v1316, %v1405
    %v1407 = vpop.f32.mrb[0].mxu0
    %1408 = vmatprep.mubr.f32.mxu0 0.0
    %v1409 = vand.u32 %v1322, 4294901760
    %v1410 = vsub.f32 %v1322, %v1409
    %v1411 = vand.u32 %v1410, 4294901760
    %v1412 = vsub.f32 %v1410, %v1411
    %v1413 = vand.u32 %v1412, 4294901760
    %1414 = vmatmul.mubr.f32.gmra.mrb[0].mxu0 %v1413
    %v1415 = vpop.f32.mrb[0].mxu0
    %v1416 = vadd.f32 %v1316, %v1415
    %v1417 = vpop.f32.mrb[0].mxu0
    %1418 = vmatprep.mubr.f32.mxu0 0.0
    %v1419 = vand.u32 %v1325, 4294901760
    %v1420 = vsub.f32 %v1325, %v1419
    %v1421 = vand.u32 %v1420, 4294901760
    %v1422 = vsub.f32 %v1420, %v1421
    %v1423 = vand.u32 %v1422, 4294901760
    %1424 = vmatmul.mubr.f32.gmra.mrb[0].mxu0 %v1423
    %v1425 = vpop.f32.mrb[0].mxu0
    %v1426 = vadd.f32 %v1316, %v1425
    %v1427 = vpop.f32.mrb[0].mxu0
    %1428 = vmatprep.mubr.f32.mxu0 0.0
    %v1429 = vand.u32 %v1328, 4294901760
    %v1430 = vsub.f32 %v1328, %v1429
    %v1431 = vand.u32 %v1430, 4294901760
    %v1432 = vsub.f32 %v1430, %v1431
    %v1433 = vand.u32 %v1432, 4294901760
    %1434 = vmatmul.mubr.f32.gmra.mrb[0].mxu0 %v1433
    %v1435 = vpop.f32.mrb[0].mxu0
    %v1436 = vadd.f32 %v1316, %v1435
    %v1437 = vpop.f32.mrb[0].mxu0
    %1438 = vdwg.mxu0
    %1439 = vmatprep.subr.mxu0 0.0
    %v1440 = vand.u32 %v607, 4294901760
    %v1441 = vsub.f32 %v607, %v1440
    %v1442 = vand.u32 %v1441, 4294901760
    %v1443 = vsub.f32 %v1441, %v1442
    %v1444 = vand.u32 %v1443, 4294901760
    %1445 = vmatpush1.msra.mxu0 %v1444
    %1446 = vmatprep.subr.mxu0 0.0
    %v1447 = vand.u32 %v613, 4294901760
    %v1448 = vsub.f32 %v613, %v1447
    %v1449 = vand.u32 %v1448, 4294901760
    %v1450 = vsub.f32 %v1448, %v1449
    %v1451 = vand.u32 %v1450, 4294901760
    %1452 = vmatpush1.msra.mxu0 %v1451
    %1453 = vmatprep.subr.mxu0 0.0
    %v1454 = vand.u32 %v619, 4294901760
    %v1455 = vsub.f32 %v619, %v1454
    %v1456 = vand.u32 %v1455, 4294901760
    %v1457 = vsub.f32 %v1455, %v1456
    %v1458 = vand.u32 %v1457, 4294901760
    %1459 = vmatpush1.msra.mxu0 %v1458
    %1460 = vmatprep.subr.mxu0 0.0
    %v1461 = vand.u32 %v625, 4294901760
    %v1462 = vsub.f32 %v625, %v1461
    %v1463 = vand.u32 %v1462, 4294901760
    %v1464 = vsub.f32 %v1462, %v1463
    %v1465 = vand.u32 %v1464, 4294901760
    %1466 = vmatpush1.msra.mxu0 %v1465
    %1467 = vmatprep.subr.mxu0 0.0
    %1468 = vmatpush1.msra.mxu0 0.0
    %1469 = vmatprep.subr.mxu0 0.0
    %1470 = vmatpush1.msra.mxu0 0.0
    %1471 = vmatprep.subr.mxu0 0.0
    %1472 = vmatpush1.msra.mxu0 0.0
    %1473 = vmatprep.subr.mxu0 0.0
    %1474 = vmatpush1.msra.mxu0 0.0
    %1475 = vmatprep.subr.mxu0 0.0
    %1476 = vmatpush1.msra.mxu0 0.0
    %1477 = vmatprep.subr.mxu0 0.0
    %1478 = vmatpush1.msra.mxu0 0.0
    %1479 = vmatprep.subr.mxu0 0.0
    %1480 = vmatpush1.msra.mxu0 0.0
    %1481 = vmatprep.subr.mxu0 0.0
    %1482 = vmatpush1.msra.mxu0 0.0
    %1483 = vmatprep.subr.mxu0 0.0
    %1484 = vmatpush1.msra.mxu0 0.0
    %1485 = vmatprep.subr.mxu0 0.0
    %1486 = vmatpush1.msra.mxu0 0.0
    %1487 = vmatprep.subr.mxu0 0.0
    %1488 = vmatpush1.msra.mxu0 0.0
    %1489 = vmatprep.subr.mxu0 0.0
    %1490 = vmatpush1.msra.mxu0 0.0
    %1491 = vmatprep.subr.mxu0 0.0
    %1492 = vmatpush1.msra.mxu0 0.0
    %1493 = vmatprep.subr.mxu0 0.0
    %1494 = vmatpush1.msra.mxu0 0.0
    %1495 = vmatprep.subr.mxu0 0.0
    %1496 = vmatpush1.msra.mxu0 0.0
    %1497 = vmatprep.subr.mxu0 0.0
    %1498 = vmatpush1.msra.mxu0 0.0
    %1499 = vmatprep.subr.mxu0 0.0
    %1500 = vmatpush1.msra.mxu0 0.0
    %1501 = vmatprep.subr.mxu0 0.0
    %1502 = vmatpush1.msra.mxu0 0.0
    %1503 = vmatprep.subr.mxu0 0.0
    %1504 = vmatpush1.msra.mxu0 0.0
    %1505 = vmatprep.subr.mxu0 0.0
    %1506 = vmatpush1.msra.mxu0 0.0
    %1507 = vmatprep.subr.mxu0 0.0
    %1508 = vmatpush1.msra.mxu0 0.0
    %1509 = vmatprep.subr.mxu0 0.0
    %1510 = vmatpush1.msra.mxu0 0.0
    %1511 = vmatprep.subr.mxu0 0.0
    %1512 = vmatpush1.msra.mxu0 0.0
    %1513 = vmatprep.subr.mxu0 0.0
    %1514 = vmatpush1.msra.mxu0 0.0
    %1515 = vmatprep.subr.mxu0 0.0
    %1516 = vmatpush1.msra.mxu0 0.0
    %1517 = vmatprep.subr.mxu0 0.0
    %1518 = vmatpush1.msra.mxu0 0.0
    %1519 = vmatprep.subr.mxu0 0.0
    %1520 = vmatpush1.msra.mxu0 0.0
    %1521 = vmatprep.subr.mxu0 0.0
    %1522 = vmatpush1.msra.mxu0 0.0
    %1523 = vmatprep.mubr.f32.mxu0 0.0
    %v1524 = vand.u32 %v1319, 4294901760
    %1525 = vmatmul.mubr.f32.gmra.mrb[0].mxu0 %v1524
    %v1526 = vpop.f32.mrb[0].mxu0
    %v1527 = vadd.f32 %v1406, %v1526
    %v1528 = vpop.f32.mrb[0].mxu0
    %1529 = vmatprep.mubr.f32.mxu0 0.0
    %v1530 = vand.u32 %v1322, 4294901760
    %1531 = vmatmul.mubr.f32.gmra.mrb[0].mxu0 %v1530
    %v1532 = vpop.f32.mrb[0].mxu0
    %v1533 = vadd.f32 %v1416, %v1532
    %v1534 = vpop.f32.mrb[0].mxu0
    %1535 = vmatprep.mubr.f32.mxu0 0.0
    %v1536 = vand.u32 %v1325, 4294901760
    %1537 = vmatmul.mubr.f32.gmra.mrb[0].mxu0 %v1536
    %v1538 = vpop.f32.mrb[0].mxu0
    %v1539 = vadd.f32 %v1426, %v1538
    %v1540 = vpop.f32.mrb[0].mxu0
    %1541 = vmatprep.mubr.f32.mxu0 0.0
    %v1542 = vand.u32 %v1328, 4294901760
    %1543 = vmatmul.mubr.f32.gmra.mrb[0].mxu0 %v1542
    %v1544 = vpop.f32.mrb[0].mxu0
    %v1545 = vadd.f32 %v1436, %v1544
    %v1546 = vpop.f32.mrb[0].mxu0
    %1547 = vdwg.mxu0
    %1548 = vmatprep.subr.mxu0 0.0
    %v1549 = vand.u32 %v607, 4294901760
    %v1550 = vsub.f32 %v607, %v1549
    %1551 = vmatpush1.msra.mxu0 %v1550
    %1552 = vmatprep.subr.mxu0 0.0
    %v1553 = vand.u32 %v613, 4294901760
    %v1554 = vsub.f32 %v613, %v1553
    %1555 = vmatpush1.msra.mxu0 %v1554
    %1556 = vmatprep.subr.mxu0 0.0
    %v1557 = vand.u32 %v619, 4294901760
    %v1558 = vsub.f32 %v619, %v1557
    %1559 = vmatpush1.msra.mxu0 %v1558
    %1560 = vmatprep.subr.mxu0 0.0
    %v1561 = vand.u32 %v625, 4294901760
    %v1562 = vsub.f32 %v625, %v1561
    %1563 = vmatpush1.msra.mxu0 %v1562
    %1564 = vmatprep.subr.mxu0 0.0
    %1565 = vmatpush1.msra.mxu0 0.0
    %1566 = vmatprep.subr.mxu0 0.0
    %1567 = vmatpush1.msra.mxu0 0.0
    %1568 = vmatprep.subr.mxu0 0.0
    %1569 = vmatpush1.msra.mxu0 0.0
    %1570 = vmatprep.subr.mxu0 0.0
    %1571 = vmatpush1.msra.mxu0 0.0
    %1572 = vmatprep.subr.mxu0 0.0
    %1573 = vmatpush1.msra.mxu0 0.0
    %1574 = vmatprep.subr.mxu0 0.0
    %1575 = vmatpush1.msra.mxu0 0.0
    %1576 = vmatprep.subr.mxu0 0.0
    %1577 = vmatpush1.msra.mxu0 0.0
    %1578 = vmatprep.subr.mxu0 0.0
    %1579 = vmatpush1.msra.mxu0 0.0
    %1580 = vmatprep.subr.mxu0 0.0
    %1581 = vmatpush1.msra.mxu0 0.0
    %1582 = vmatprep.subr.mxu0 0.0
    %1583 = vmatpush1.msra.mxu0 0.0
    %1584 = vmatprep.subr.mxu0 0.0
    %1585 = vmatpush1.msra.mxu0 0.0
    %1586 = vmatprep.subr.mxu0 0.0
    %1587 = vmatpush1.msra.mxu0 0.0
    %1588 = vmatprep.subr.mxu0 0.0
    %1589 = vmatpush1.msra.mxu0 0.0
    %1590 = vmatprep.subr.mxu0 0.0
    %1591 = vmatpush1.msra.mxu0 0.0
    %1592 = vmatprep.subr.mxu0 0.0
    %1593 = vmatpush1.msra.mxu0 0.0
    %1594 = vmatprep.subr.mxu0 0.0
    %1595 = vmatpush1.msra.mxu0 0.0
    %1596 = vmatprep.subr.mxu0 0.0
    %1597 = vmatpush1.msra.mxu0 0.0
    %1598 = vmatprep.subr.mxu0 0.0
    %1599 = vmatpush1.msra.mxu0 0.0
    %1600 = vmatprep.subr.mxu0 0.0
    %1601 = vmatpush1.msra.mxu0 0.0
    %1602 = vmatprep.subr.mxu0 0.0
    %1603 = vmatpush1.msra.mxu0 0.0
    %1604 = vmatprep.subr.mxu0 0.0
    %1605 = vmatpush1.msra.mxu0 0.0
    %1606 = vmatprep.subr.mxu0 0.0
    %1607 = vmatpush1.msra.mxu0 0.0
    %1608 = vmatprep.subr.mxu0 0.0
    %1609 = vmatpush1.msra.mxu0 0.0
    %1610 = vmatprep.subr.mxu0 0.0
    %1611 = vmatpush1.msra.mxu0 0.0
    %1612 = vmatprep.subr.mxu0 0.0
    %1613 = vmatpush1.msra.mxu0 0.0
    %1614 = vmatprep.subr.mxu0 0.0
    %1615 = vmatpush1.msra.mxu0 0.0
    %1616 = vmatprep.subr.mxu0 0.0
    %1617 = vmatpush1.msra.mxu0 0.0
    %1618 = vmatprep.subr.mxu0 0.0
    %1619 = vmatpush1.msra.mxu0 0.0
    %1620 = vmatprep.mubr.f32.mxu0 0.0
    %v1621 = vand.u32 %v1319, 4294901760
    %v1622 = vsub.f32 %v1319, %v1621
    %1623 = vmatmul.mubr.f32.gmra.mrb[0].mxu0 %v1622
    %v1624 = vpop.f32.mrb[0].mxu0
    %v1625 = vadd.f32 %v1527, %v1624
    %v1626 = vpop.f32.mrb[0].mxu0
    %1627 = vmatprep.mubr.f32.mxu0 0.0
    %v1628 = vand.u32 %v1322, 4294901760
    %v1629 = vsub.f32 %v1322, %v1628
    %1630 = vmatmul.mubr.f32.gmra.mrb[0].mxu0 %v1629
    %v1631 = vpop.f32.mrb[0].mxu0
    %v1632 = vadd.f32 %v1533, %v1631
    %v1633 = vpop.f32.mrb[0].mxu0
    %1634 = vmatprep.mubr.f32.mxu0 0.0
    %v1635 = vand.u32 %v1325, 4294901760
    %v1636 = vsub.f32 %v1325, %v1635
    %1637 = vmatmul.mubr.f32.gmra.mrb[0].mxu0 %v1636
    %v1638 = vpop.f32.mrb[0].mxu0
    %v1639 = vadd.f32 %v1539, %v1638
    %v1640 = vpop.f32.mrb[0].mxu0
    %1641 = vmatprep.mubr.f32.mxu0 0.0
    %v1642 = vand.u32 %v1328, 4294901760
    %v1643 = vsub.f32 %v1328, %v1642
    %1644 = vmatmul.mubr.f32.gmra.mrb[0].mxu0 %v1643
    %v1645 = vpop.f32.mrb[0].mxu0
    %v1646 = vadd.f32 %v1545, %v1645
    %v1647 = vpop.f32.mrb[0].mxu0
    %1648 = vdwg.mxu0
    %1649 = vmatprep.subr.mxu0 0.0
    %v1650 = vand.u32 %v607, 4294901760
    %1651 = vmatpush1.msra.mxu0 %v1650
    %1652 = vmatprep.subr.mxu0 0.0
    %v1653 = vand.u32 %v613, 4294901760
    %1654 = vmatpush1.msra.mxu0 %v1653
    %1655 = vmatprep.subr.mxu0 0.0
    %v1656 = vand.u32 %v619, 4294901760
    %1657 = vmatpush1.msra.mxu0 %v1656
    %1658 = vmatprep.subr.mxu0 0.0
    %v1659 = vand.u32 %v625, 4294901760
    %1660 = vmatpush1.msra.mxu0 %v1659
    %1661 = vmatprep.subr.mxu0 0.0
    %1662 = vmatpush1.msra.mxu0 0.0
    %1663 = vmatprep.subr.mxu0 0.0
    %1664 = vmatpush1.msra.mxu0 0.0
    %1665 = vmatprep.subr.mxu0 0.0
    %1666 = vmatpush1.msra.mxu0 0.0
    %1667 = vmatprep.subr.mxu0 0.0
    %1668 = vmatpush1.msra.mxu0 0.0
    %1669 = vmatprep.subr.mxu0 0.0
    %1670 = vmatpush1.msra.mxu0 0.0
    %1671 = vmatprep.subr.mxu0 0.0
    %1672 = vmatpush1.msra.mxu0 0.0
    %1673 = vmatprep.subr.mxu0 0.0
    %1674 = vmatpush1.msra.mxu0 0.0
    %1675 = vmatprep.subr.mxu0 0.0
    %1676 = vmatpush1.msra.mxu0 0.0
    %1677 = vmatprep.subr.mxu0 0.0
    %1678 = vmatpush1.msra.mxu0 0.0
    %1679 = vmatprep.subr.mxu0 0.0
    %1680 = vmatpush1.msra.mxu0 0.0
    %1681 = vmatprep.subr.mxu0 0.0
    %1682 = vmatpush1.msra.mxu0 0.0
    %1683 = vmatprep.subr.mxu0 0.0
    %1684 = vmatpush1.msra.mxu0 0.0
    %1685 = vmatprep.subr.mxu0 0.0
    %1686 = vmatpush1.msra.mxu0 0.0
    %1687 = vmatprep.subr.mxu0 0.0
    %1688 = vmatpush1.msra.mxu0 0.0
    %1689 = vmatprep.subr.mxu0 0.0
    %1690 = vmatpush1.msra.mxu0 0.0
    %1691 = vmatprep.subr.mxu0 0.0
    %1692 = vmatpush1.msra.mxu0 0.0
    %1693 = vmatprep.subr.mxu0 0.0
    %1694 = vmatpush1.msra.mxu0 0.0
    %1695 = vmatprep.subr.mxu0 0.0
    %1696 = vmatpush1.msra.mxu0 0.0
    %1697 = vmatprep.subr.mxu0 0.0
    %1698 = vmatpush1.msra.mxu0 0.0
    %1699 = vmatprep.subr.mxu0 0.0
    %1700 = vmatpush1.msra.mxu0 0.0
    %1701 = vmatprep.subr.mxu0 0.0
    %1702 = vmatpush1.msra.mxu0 0.0
    %1703 = vmatprep.subr.mxu0 0.0
    %1704 = vmatpush1.msra.mxu0 0.0
    %1705 = vmatprep.subr.mxu0 0.0
    %1706 = vmatpush1.msra.mxu0 0.0
    %1707 = vmatprep.subr.mxu0 0.0
    %1708 = vmatpush1.msra.mxu0 0.0
    %1709 = vmatprep.subr.mxu0 0.0
    %1710 = vmatpush1.msra.mxu0 0.0
    %1711 = vmatprep.subr.mxu0 0.0
    %1712 = vmatpush1.msra.mxu0 0.0
    %1713 = vmatprep.subr.mxu0 0.0
    %1714 = vmatpush1.msra.mxu0 0.0
    %1715 = vmatprep.subr.mxu0 0.0
    %1716 = vmatpush1.msra.mxu0 0.0
    %1717 = vmatprep.mubr.f32.mxu0 0.0
    %v1718 = vand.u32 %v1319, 4294901760
    %v1719 = vsub.f32 %v1319, %v1718
    %v1720 = vand.u32 %v1719, 4294901760
    %1721 = vmatmul.mubr.f32.gmra.mrb[0].mxu0 %v1720
    %v1722 = vpop.f32.mrb[0].mxu0
    %v1723 = vadd.f32 %v1625, %v1722
    %v1724 = vpop.f32.mrb[0].mxu0
    %1725 = vmatprep.mubr.f32.mxu0 0.0
    %v1726 = vand.u32 %v1322, 4294901760
    %v1727 = vsub.f32 %v1322, %v1726
    %v1728 = vand.u32 %v1727, 4294901760
    %1729 = vmatmul.mubr.f32.gmra.mrb[0].mxu0 %v1728
    %v1730 = vpop.f32.mrb[0].mxu0
    %v1731 = vadd.f32 %v1632, %v1730
    %v1732 = vpop.f32.mrb[0].mxu0
    %1733 = vmatprep.mubr.f32.mxu0 0.0
    %v1734 = vand.u32 %v1325, 4294901760
    %v1735 = vsub.f32 %v1325, %v1734
    %v1736 = vand.u32 %v1735, 4294901760
    %1737 = vmatmul.mubr.f32.gmra.mrb[0].mxu0 %v1736
    %v1738 = vpop.f32.mrb[0].mxu0
    %v1739 = vadd.f32 %v1639, %v1738
    %v1740 = vpop.f32.mrb[0].mxu0
    %1741 = vmatprep.mubr.f32.mxu0 0.0
    %v1742 = vand.u32 %v1328, 4294901760
    %v1743 = vsub.f32 %v1328, %v1742
    %v1744 = vand.u32 %v1743, 4294901760
    %1745 = vmatmul.mubr.f32.gmra.mrb[0].mxu0 %v1744
    %v1746 = vpop.f32.mrb[0].mxu0
    %v1747 = vadd.f32 %v1646, %v1746
    %v1748 = vpop.f32.mrb[0].mxu0
    %1749 = vdwg.mxu0
    %1750 = vmatprep.subr.mxu0 0.0
    %v1751 = vand.u32 %v607, 4294901760
    %v1752 = vsub.f32 %v607, %v1751
    %v1753 = vand.u32 %v1752, 4294901760
    %1754 = vmatpush1.msra.mxu0 %v1753
    %1755 = vmatprep.subr.mxu0 0.0
    %v1756 = vand.u32 %v613, 4294901760
    %v1757 = vsub.f32 %v613, %v1756
    %v1758 = vand.u32 %v1757, 4294901760
    %1759 = vmatpush1.msra.mxu0 %v1758
    %1760 = vmatprep.subr.mxu0 0.0
    %v1761 = vand.u32 %v619, 4294901760
    %v1762 = vsub.f32 %v619, %v1761
    %v1763 = vand.u32 %v1762, 4294901760
    %1764 = vmatpush1.msra.mxu0 %v1763
    %1765 = vmatprep.subr.mxu0 0.0
    %v1766 = vand.u32 %v625, 4294901760
    %v1767 = vsub.f32 %v625, %v1766
    %v1768 = vand.u32 %v1767, 4294901760
    %1769 = vmatpush1.msra.mxu0 %v1768
    %1770 = vmatprep.subr.mxu0 0.0
    %1771 = vmatpush1.msra.mxu0 0.0
    %1772 = vmatprep.subr.mxu0 0.0
    %1773 = vmatpush1.msra.mxu0 0.0
    %1774 = vmatprep.subr.mxu0 0.0
    %1775 = vmatpush1.msra.mxu0 0.0
    %1776 = vmatprep.subr.mxu0 0.0
    %1777 = vmatpush1.msra.mxu0 0.0
    %1778 = vmatprep.subr.mxu0 0.0
    %1779 = vmatpush1.msra.mxu0 0.0
    %1780 = vmatprep.subr.mxu0 0.0
    %1781 = vmatpush1.msra.mxu0 0.0
    %1782 = vmatprep.subr.mxu0 0.0
    %1783 = vmatpush1.msra.mxu0 0.0
    %1784 = vmatprep.subr.mxu0 0.0
    %1785 = vmatpush1.msra.mxu0 0.0
    %1786 = vmatprep.subr.mxu0 0.0
    %1787 = vmatpush1.msra.mxu0 0.0
    %1788 = vmatprep.subr.mxu0 0.0
    %1789 = vmatpush1.msra.mxu0 0.0
    %1790 = vmatprep.subr.mxu0 0.0
    %1791 = vmatpush1.msra.mxu0 0.0
    %1792 = vmatprep.subr.mxu0 0.0
    %1793 = vmatpush1.msra.mxu0 0.0
    %1794 = vmatprep.subr.mxu0 0.0
    %1795 = vmatpush1.msra.mxu0 0.0
    %1796 = vmatprep.subr.mxu0 0.0
    %1797 = vmatpush1.msra.mxu0 0.0
    %1798 = vmatprep.subr.mxu0 0.0
    %1799 = vmatpush1.msra.mxu0 0.0
    %1800 = vmatprep.subr.mxu0 0.0
    %1801 = vmatpush1.msra.mxu0 0.0
    %1802 = vmatprep.subr.mxu0 0.0
    %1803 = vmatpush1.msra.mxu0 0.0
    %1804 = vmatprep.subr.mxu0 0.0
    %1805 = vmatpush1.msra.mxu0 0.0
    %1806 = vmatprep.subr.mxu0 0.0
    %1807 = vmatpush1.msra.mxu0 0.0
    %1808 = vmatprep.subr.mxu0 0.0
    %1809 = vmatpush1.msra.mxu0 0.0
    %1810 = vmatprep.subr.mxu0 0.0
    %1811 = vmatpush1.msra.mxu0 0.0
    %1812 = vmatprep.subr.mxu0 0.0
    %1813 = vmatpush1.msra.mxu0 0.0
    %1814 = vmatprep.subr.mxu0 0.0
    %1815 = vmatpush1.msra.mxu0 0.0
    %1816 = vmatprep.subr.mxu0 0.0
    %1817 = vmatpush1.msra.mxu0 0.0
    %1818 = vmatprep.subr.mxu0 0.0
    %1819 = vmatpush1.msra.mxu0 0.0
    %1820 = vmatprep.subr.mxu0 0.0
    %1821 = vmatpush1.msra.mxu0 0.0
    %1822 = vmatprep.subr.mxu0 0.0
    %1823 = vmatpush1.msra.mxu0 0.0
    %1824 = vmatprep.subr.mxu0 0.0
    %1825 = vmatpush1.msra.mxu0 0.0
    %1826 = vmatprep.mubr.f32.mxu0 0.0
    %v1827 = vand.u32 %v1319, 4294901760
    %1828 = vmatmul.mubr.f32.gmra.mrb[0].mxu0 %v1827
    %v1829 = vpop.f32.mrb[0].mxu0
    %v1830 = vadd.f32 %v1723, %v1829
    %v1831 = vpop.f32.mrb[0].mxu0
    %1832 = vmatprep.mubr.f32.mxu0 0.0
    %v1833 = vand.u32 %v1322, 4294901760
    %1834 = vmatmul.mubr.f32.gmra.mrb[0].mxu0 %v1833
    %v1835 = vpop.f32.mrb[0].mxu0
    %v1836 = vadd.f32 %v1731, %v1835
    %v1837 = vpop.f32.mrb[0].mxu0
    %1838 = vmatprep.mubr.f32.mxu0 0.0
    %v1839 = vand.u32 %v1325, 4294901760
    %1840 = vmatmul.mubr.f32.gmra.mrb[0].mxu0 %v1839
    %v1841 = vpop.f32.mrb[0].mxu0
    %v1842 = vadd.f32 %v1739, %v1841
    %v1843 = vpop.f32.mrb[0].mxu0
    %1844 = vmatprep.mubr.f32.mxu0 0.0
    %v1845 = vand.u32 %v1328, 4294901760
    %1846 = vmatmul.mubr.f32.gmra.mrb[0].mxu0 %v1845
    %v1847 = vpop.f32.mrb[0].mxu0
    %v1848 = vadd.f32 %v1747, %v1847
    %v1849 = vpop.f32.mrb[0].mxu0
    %1850 = vdwg.mxu0
    %1851 = vmatprep.subr.mxu0 0.0
    %v1852 = vand.u32 %v607, 4294901760
    %1853 = vmatpush1.msra.mxu0 %v1852
    %1854 = vmatprep.subr.mxu0 0.0
    %v1855 = vand.u32 %v613, 4294901760
    %1856 = vmatpush1.msra.mxu0 %v1855
    %1857 = vmatprep.subr.mxu0 0.0
    %v1858 = vand.u32 %v619, 4294901760
    %1859 = vmatpush1.msra.mxu0 %v1858
    %1860 = vmatprep.subr.mxu0 0.0
    %v1861 = vand.u32 %v625, 4294901760
    %1862 = vmatpush1.msra.mxu0 %v1861
    %1863 = vmatprep.subr.mxu0 0.0
    %1864 = vmatpush1.msra.mxu0 0.0
    %1865 = vmatprep.subr.mxu0 0.0
    %1866 = vmatpush1.msra.mxu0 0.0
    %1867 = vmatprep.subr.mxu0 0.0
    %1868 = vmatpush1.msra.mxu0 0.0
    %1869 = vmatprep.subr.mxu0 0.0
    %1870 = vmatpush1.msra.mxu0 0.0
    %1871 = vmatprep.subr.mxu0 0.0
    %1872 = vmatpush1.msra.mxu0 0.0
    %1873 = vmatprep.subr.mxu0 0.0
    %1874 = vmatpush1.msra.mxu0 0.0
    %1875 = vmatprep.subr.mxu0 0.0
    %1876 = vmatpush1.msra.mxu0 0.0
    %1877 = vmatprep.subr.mxu0 0.0
    %1878 = vmatpush1.msra.mxu0 0.0
    %1879 = vmatprep.subr.mxu0 0.0
    %1880 = vmatpush1.msra.mxu0 0.0
    %1881 = vmatprep.subr.mxu0 0.0
    %1882 = vmatpush1.msra.mxu0 0.0
    %1883 = vmatprep.subr.mxu0 0.0
    %1884 = vmatpush1.msra.mxu0 0.0
    %1885 = vmatprep.subr.mxu0 0.0
    %1886 = vmatpush1.msra.mxu0 0.0
    %1887 = vmatprep.subr.mxu0 0.0
    %1888 = vmatpush1.msra.mxu0 0.0
    %1889 = vmatprep.subr.mxu0 0.0
    %1890 = vmatpush1.msra.mxu0 0.0
    %1891 = vmatprep.subr.mxu0 0.0
    %1892 = vmatpush1.msra.mxu0 0.0
    %1893 = vmatprep.subr.mxu0 0.0
    %1894 = vmatpush1.msra.mxu0 0.0
    %1895 = vmatprep.subr.mxu0 0.0
    %1896 = vmatpush1.msra.mxu0 0.0
    %1897 = vmatprep.subr.mxu0 0.0
    %1898 = vmatpush1.msra.mxu0 0.0
    %1899 = vmatprep.subr.mxu0 0.0
    %1900 = vmatpush1.msra.mxu0 0.0
    %1901 = vmatprep.subr.mxu0 0.0
    %1902 = vmatpush1.msra.mxu0 0.0
    %1903 = vmatprep.subr.mxu0 0.0
    %1904 = vmatpush1.msra.mxu0 0.0
    %1905 = vmatprep.subr.mxu0 0.0
    %1906 = vmatpush1.msra.mxu0 0.0
    %1907 = vmatprep.subr.mxu0 0.0
    %1908 = vmatpush1.msra.mxu0 0.0
    %1909 = vmatprep.subr.mxu0 0.0
    %1910 = vmatpush1.msra.mxu0 0.0
    %1911 = vmatprep.subr.mxu0 0.0
    %1912 = vmatpush1.msra.mxu0 0.0
    %1913 = vmatprep.subr.mxu0 0.0
    %1914 = vmatpush1.msra.mxu0 0.0
    %1915 = vmatprep.subr.mxu0 0.0
    %1916 = vmatpush1.msra.mxu0 0.0
    %1917 = vmatprep.subr.mxu0 0.0
    %1918 = vmatpush1.msra.mxu0 0.0
    %1919 = vmatprep.mubr.f32.mxu0 0.0
    %v1920 = vand.u32 %v1319, 4294901760
    %1921 = vmatmul.mubr.f32.gmra.mrb[0].mxu0 %v1920
    %v1922 = vpop.f32.mrb[0].mxu0
    %v1923 = vadd.f32 %v1830, %v1922
    %v1924 = vpop.f32.mrb[0].mxu0
    %1925 = vmatprep.mubr.f32.mxu0 0.0
    %v1926 = vand.u32 %v1322, 4294901760
    %1927 = vmatmul.mubr.f32.gmra.mrb[0].mxu0 %v1926
    %v1928 = vpop.f32.mrb[0].mxu0
    %v1929 = vadd.f32 %v1836, %v1928
    %v1930 = vpop.f32.mrb[0].mxu0
    %1931 = vmatprep.mubr.f32.mxu0 0.0
    %v1932 = vand.u32 %v1325, 4294901760
    %1933 = vmatmul.mubr.f32.gmra.mrb[0].mxu0 %v1932
    %v1934 = vpop.f32.mrb[0].mxu0
    %v1935 = vadd.f32 %v1842, %v1934
    %v1936 = vpop.f32.mrb[0].mxu0
    %1937 = vmatprep.mubr.f32.mxu0 0.0
    %v1938 = vand.u32 %v1328, 4294901760
    %1939 = vmatmul.mubr.f32.gmra.mrb[0].mxu0 %v1938
    %v1940 = vpop.f32.mrb[0].mxu0
    %v1941 = vadd.f32 %v1848, %v1940
    %v1942 = vpop.f32.mrb[0].mxu0
    %1943 = vdwg.mxu0
    %1944 = vst [vmem:[#allocation5] sm:$0xff] %v1923
    %1945 = vst [vmem:[#allocation5 + $0x8] sm:$0xff] %v1929
    %1946 = vst [vmem:[#allocation5 + $0x10] sm:$0xff] %v1935
    %1947 = vst [vmem:[#allocation5 + $0x18] sm:$0xff] %v1941
    // Predicated region
    $region26: #{tpu_custom_call.1} parent=1 // pred_check
      _
    $region27: #{tpu_custom_call.1} parent=1 // pred_check_branch
      %1949 = sbr.rel (0) target = $region29
    $region28: #{tpu_custom_call.1} parent=1 // pred_region
      %s1951 = ssub.s32 512, 512
      %1952 = vsyncadd [#allocation4], %s1951
      %s1953 = sshll.u32 [#allocation5], 4
      %s1954 = int_to_ptr.vmem [resolvable:$true] %s1953
      %1959 = dma.vmem_to_hbm [thread:$0]  %s1954, 512, %s5, [#allocation4], 128, 128, 8
    $region29: #{tpu_custom_call.1} parent=1 // pred_fallthru
      _
    // Predicated region
    $region30: #{tpu_custom_call.1} parent=1 // pred_check
      _
    $region31: #{tpu_custom_call.1} parent=1 // pred_check_branch
      %1961 = sbr.rel (0) target = $region33
    $region32: #{tpu_custom_call.1} parent=1 // pred_region
      %1962 = dma.done [#allocation4], 512
    $region33: #{tpu_custom_call.1} parent=1 // pred_fallthru
      _
    %1963 = vsyncpa [#allocation3], 1
    %1964 = vsyncpa [#allocation4], 1

</llo_original>
